<compile_context>
chip_gen: v5e
topology: v5e:2x2
jax: 0.10.0
libtpu: 0.0.40
codegen_flags: <defaults>
</compile_context>

<pallas_src>
import jax
import jax.numpy as jnp
from jax import lax
from jax.experimental import pallas as pl
from jax.experimental.pallas import tpu as pltpu


def se1d_kernel(x_ref, w1t_ref, w2t_ref, pool_ref, expand_ref, o_ref):
    # x_ref:      (1, TB, C*L)  batch tile, native dtype, lane-dense
    # w1t_ref:    (C, H)        transposed first linear weight  (f32)
    # w2t_ref:    (H, C)        transposed second linear weight (f32)
    # pool_ref:   (C*L, C)      pool[c*L + l, c] = 1/L  -> channel means on MXU
    # expand_ref: (C, C*L)      expand[c, c*L + l] = 1  -> gate broadcast on MXU
    # o_ref:      (1, TB, C*L)
    x = x_ref[0]                                        # (TB, C*L) native dtype

    # ---- squeeze: AdaptiveAvgPool1d(1) == per-channel mean over L (MXU) ----
    y = jnp.dot(x, pool_ref[...],
                preferred_element_type=jnp.float32,
                precision=lax.Precision.HIGHEST)        # (TB, C) f32

    # ---- excitation: Linear -> ReLU -> Linear -> Sigmoid (all f32) ----
    h = jnp.dot(y, w1t_ref[...],
                preferred_element_type=jnp.float32,
                precision=lax.Precision.HIGHEST)        # (TB, H)
    h = jnp.maximum(h, 0.0)
    s = jnp.dot(h, w2t_ref[...],
                preferred_element_type=jnp.float32,
                precision=lax.Precision.HIGHEST)        # (TB, C)
    s = jax.nn.sigmoid(s)

    # ---- broadcast gate to (TB, C*L) lane-dense via one-hot expand (MXU) ----
    scale = jnp.dot(s, expand_ref[...],
                    preferred_element_type=jnp.float32,
                    precision=lax.Precision.HIGHEST)    # (TB, C*L) f32

    # ---- scale: x * gate, single lane-dense store in the input dtype ----
    o_ref[0] = (x * scale.astype(x.dtype)).astype(o_ref.dtype)


def _choose_batch_tile(B, CL, itemsize, const_bytes,
                       vmem_tile_budget=24 << 20):
    """Largest divisor TB of B whose double-buffered in+out tiles (+ f32 temps)
    fit the budget, preferring >= 2 grid steps (v7x megacore)."""
    def footprint(tb):
        # 2x double-buffered input + output tiles, f32 scale temp, constants.
        return 4 * tb * CL * itemsize + tb * CL * 4 + const_bytes

    divisors = [d for d in range(1, B + 1) if B % d == 0]
    fitting = [d for d in divisors if footprint(d) <= vmem_tile_budget] or [1]
    multi_step = [d for d in fitting if B // d >= 2]
    return max(multi_step) if multi_step else max(fitting)


def squeeze_excitation_1d(x, w1, w2):
    """x: (B, C, L); w1: (H, C); w2: (C, H) (PyTorch Linear weight layout)."""
    B, C, L = x.shape
    H = w1.shape[0]
    CL = C * L
    itemsize = int(jnp.dtype(x.dtype).itemsize)

    const_bytes = 2 * 4 * (C * H + H * C + CL * C + C * CL)
    TB = _choose_batch_tile(B, CL, itemsize, const_bytes)
    nB = B // TB

    # Free, contiguous reshape: lane-dense last dim of size C*L.
    x3 = x.reshape(nB, TB, CL)

    w1_t = jnp.asarray(w1, dtype=jnp.float32).T                 # (C, H)
    w2_t = jnp.asarray(w2, dtype=jnp.float32).T                 # (H, C)
    # pool[c*L + l, c] = 1/L  (built once in the wrapper; tiny)
    pool = (jnp.repeat(jnp.eye(C, dtype=jnp.float32), L, axis=0)
            * (1.0 / L)).astype(x.dtype)                        # (C*L, C)
    # expand[c, c*L + l] = 1
    expand = jnp.repeat(jnp.eye(C, dtype=jnp.float32), L, axis=1)  # (C, C*L)

    cost = pl.CostEstimate(
        flops=int(4 * B * CL * C + 4 * B * C * H + B * CL),
        transcendentals=int(B * C),
        bytes_accessed=int(2 * B * CL * itemsize + const_bytes // 2),
    )

    out3 = pl.pallas_call(
        se1d_kernel,
        out_shape=jax.ShapeDtypeStruct((nB, TB, CL), x.dtype),
        grid_spec=pltpu.PrefetchScalarGridSpec(
            num_scalar_prefetch=0,
            grid=(nB,),
            in_specs=[
                pl.BlockSpec((1, TB, CL), lambda i: (i, 0, 0)),
                pl.BlockSpec((C, H), lambda i: (0, 0)),
                pl.BlockSpec((H, C), lambda i: (0, 0)),
                pl.BlockSpec((CL, C), lambda i: (0, 0)),
                pl.BlockSpec((C, CL), lambda i: (0, 0)),
            ],
            out_specs=pl.BlockSpec((1, TB, CL), lambda i: (i, 0, 0)),
        ),
        compiler_params=pltpu.CompilerParams(
            dimension_semantics=("parallel",),
            vmem_limit_bytes=48 << 20,
        ),
        cost_estimate=cost,
    )(x3, w1_t, w2_t, pool, expand)

    return out3.reshape(B, C, L)


def squeeze_excitation_1d_ref(x, w1, w2):
    """Pure-JAX reference mirroring the PyTorch forward (f32 math)."""
    xf = x.astype(jnp.float32)
    y = jnp.mean(xf, axis=-1)                                        # (B, C)
    h = jnp.maximum(jnp.dot(y, w1.T, precision=lax.Precision.HIGHEST), 0.0)
    s = jax.nn.sigmoid(jnp.dot(h, w2.T, precision=lax.Precision.HIGHEST))
    return (xf * s[:, :, None]).astype(x.dtype)


if __name__ == "__main__":
    # Small shapes consistent with the module: batch=2, channels=32, length=16,
    # reduction_ratio=16 -> hidden = 32 // 16 = 2.
    B, C, L = 2, 32, 16
    reduction_ratio = 16
    H = C // reduction_ratio

    key = jax.random.PRNGKey(0)
    kx, k1, k2 = jax.random.split(key, 3)

    x = jax.random.normal(kx, (B, C, L), dtype=jnp.float32)

    # Deterministic weight init, PyTorch-Linear-style U(-1/sqrt(fan_in), 1/sqrt(fan_in)).
    w1 = jax.random.uniform(k1, (H, C), dtype=jnp.float32,
                            minval=-1.0 / jnp.sqrt(C), maxval=1.0 / jnp.sqrt(C))
    w2 = jax.random.uniform(k2, (C, H), dtype=jnp.float32,
                            minval=-1.0 / jnp.sqrt(H), maxval=1.0 / jnp.sqrt(H))

    out = squeeze_excitation_1d(x, w1, w2)
    out = jax.block_until_ready(out)

    ref = squeeze_excitation_1d_ref(x, w1, w2)
    assert out.shape == (B, C, L)
    # Tolerance covers MXU f32-emulation / summation-order rounding in the
    # matmul-based pooling and gate-broadcast (still far below any real bug).
    assert jnp.allclose(out, ref, atol=1e-4, rtol=1e-4), "mismatch vs reference"

    print("KERNEL_OK")
</pallas_src>

<mosaic_0001>
module attributes {stable_mosaic.version = 11 : i64} {
  func.func @se1d_kernel(%arg0: i32, %arg1: memref<1x1x512xf32, #tpu.memory_space<vmem>>, %arg2: memref<32x2xf32, #tpu.memory_space<vmem>>, %arg3: memref<2x32xf32, #tpu.memory_space<vmem>>, %arg4: memref<512x32xf32, #tpu.memory_space<vmem>>, %arg5: memref<32x512xf32, #tpu.memory_space<vmem>>, %arg6: memref<1x1x512xf32, #tpu.memory_space<vmem>>) attributes {dimension_semantics = [#tpu.dimension_semantics<parallel>], iteration_bounds = array<i64: 2>, scalar_prefetch = 0 : i64, scratch_operands = 0 : i64, tpu.core_type = #tpu.core_type<tc>, window_params = [{transform_indices = @transform_0, window_bounds = array<i64: 1, 1, 512>}, {pipeline_mode = #tpu.pipeline_mode<synchronous>, transform_indices = @transform_1, window_bounds = array<i64: 32, 2>}, {pipeline_mode = #tpu.pipeline_mode<synchronous>, transform_indices = @transform_2, window_bounds = array<i64: 2, 32>}, {pipeline_mode = #tpu.pipeline_mode<synchronous>, transform_indices = @transform_3, window_bounds = array<i64: 512, 32>}, {pipeline_mode = #tpu.pipeline_mode<synchronous>, transform_indices = @transform_4, window_bounds = array<i64: 32, 512>}, {transform_indices = @transform_5, window_bounds = array<i64: 1, 1, 512>}]} {
    %c0 = arith.constant 0 : index
    %c0_0 = arith.constant 0 : index
    %c0_1 = arith.constant 0 : index
    %0 = vector.load %arg1[%c0, %c0_0, %c0_1] : memref<1x1x512xf32, #tpu.memory_space<vmem>>, vector<1x1x512xf32>
    %1 = vector.shape_cast %0 : vector<1x1x512xf32> to vector<1x512xf32>
    %c0_2 = arith.constant 0 : index
    %c0_3 = arith.constant 0 : index
    %2 = vector.load %arg4[%c0_2, %c0_3] : memref<512x32xf32, #tpu.memory_space<vmem>>, vector<512x32xf32>
    %cst = arith.constant dense<0.000000e+00> : vector<1x32xf32>
    %3 = tpu.matmul %1, %2, %cst {dimension_numbers = #tpu.dot_dimension_numbers<[1], [0], [0], [1], [0, 0, 1, 1], [], []>, precision = #tpu.contract_precision<fp32>} : vector<1x512xf32>, vector<512x32xf32>, vector<1x32xf32> -> vector<1x32xf32>
    %c0_4 = arith.constant 0 : index
    %c0_5 = arith.constant 0 : index
    %4 = vector.load %arg2[%c0_4, %c0_5] : memref<32x2xf32, #tpu.memory_space<vmem>>, vector<32x2xf32>
    %cst_6 = arith.constant dense<0.000000e+00> : vector<1x2xf32>
    %5 = tpu.matmul %3, %4, %cst_6 {dimension_numbers = #tpu.dot_dimension_numbers<[1], [0], [0], [1], [0, 0, 1, 1], [], []>, precision = #tpu.contract_precision<fp32>} : vector<1x32xf32>, vector<32x2xf32>, vector<1x2xf32> -> vector<1x2xf32>
    %cst_7 = arith.constant 0.000000e+00 : f32
    %6 = vector.broadcast %cst_7 : f32 to vector<1x2xf32>
    %7 = arith.maximumf %5, %6 : vector<1x2xf32>
    %c0_8 = arith.constant 0 : index
    %c0_9 = arith.constant 0 : index
    %8 = vector.load %arg3[%c0_8, %c0_9] : memref<2x32xf32, #tpu.memory_space<vmem>>, vector<2x32xf32>
    %cst_10 = arith.constant dense<0.000000e+00> : vector<1x32xf32>
    %9 = tpu.matmul %7, %8, %cst_10 {dimension_numbers = #tpu.dot_dimension_numbers<[1], [0], [0], [1], [0, 0, 1, 1], [], []>, precision = #tpu.contract_precision<fp32>} : vector<1x2xf32>, vector<2x32xf32>, vector<1x32xf32> -> vector<1x32xf32>
    %10 = arith.negf %9 : vector<1x32xf32>
    %11 = math.exp %10 : vector<1x32xf32>
    %cst_11 = arith.constant 1.000000e+00 : f32
    %12 = vector.broadcast %cst_11 : f32 to vector<1x32xf32>
    %13 = arith.addf %12, %11 : vector<1x32xf32>
    %14 = arith.divf %12, %13 : vector<1x32xf32>
    %c0_12 = arith.constant 0 : index
    %c0_13 = arith.constant 0 : index
    %15 = vector.load %arg5[%c0_12, %c0_13] : memref<32x512xf32, #tpu.memory_space<vmem>>, vector<32x512xf32>
    %cst_14 = arith.constant dense<0.000000e+00> : vector<1x512xf32>
    %16 = tpu.matmul %14, %15, %cst_14 {dimension_numbers = #tpu.dot_dimension_numbers<[1], [0], [0], [1], [0, 0, 1, 1], [], []>, precision = #tpu.contract_precision<fp32>} : vector<1x32xf32>, vector<32x512xf32>, vector<1x512xf32> -> vector<1x512xf32>
    %17 = arith.mulf %1, %16 : vector<1x512xf32>
    %c0_15 = arith.constant 0 : index
    %c0_16 = arith.constant 0 : index
    %c0_17 = arith.constant 0 : index
    %18 = vector.load %arg6[%c0_15, %c0_16, %c0_17] : memref<1x1x512xf32, #tpu.memory_space<vmem>>, vector<1x1x512xf32>
    %19 = vector.shape_cast %18 : vector<1x1x512xf32> to vector<1x512xf32>
    %20 = vector.shape_cast %17 : vector<1x512xf32> to vector<1x1x512xf32>
    tpu.vector_store %arg6[%c0_15, %c0_16, %c0_17], %20 {strides = array<i32>} : memref<1x1x512xf32, #tpu.memory_space<vmem>>, vector<1x1x512xf32>,
    return
  }
  func.func @transform_0(%arg0: i32) -> (i32, i32, i32) {
    %c0_i32 = arith.constant 0 : i32
    %c0_i32_0 = arith.constant 0 : i32
    %c0_i32_1 = arith.constant 0 : i32
    return %arg0, %c0_i32, %c0_i32_0 : i32, i32, i32
  }
  func.func @transform_1(%arg0: i32) -> (i32, i32) {
    %c0_i32 = arith.constant 0 : i32
    %c0_i32_0 = arith.constant 0 : i32
    %c0_i32_1 = arith.constant 0 : i32
    return %c0_i32, %c0_i32_0 : i32, i32
  }
  func.func @transform_2(%arg0: i32) -> (i32, i32) {
    %c0_i32 = arith.constant 0 : i32
    %c0_i32_0 = arith.constant 0 : i32
    %c0_i32_1 = arith.constant 0 : i32
    return %c0_i32, %c0_i32_0 : i32, i32
  }
  func.func @transform_3(%arg0: i32) -> (i32, i32) {
    %c0_i32 = arith.constant 0 : i32
    %c0_i32_0 = arith.constant 0 : i32
    %c0_i32_1 = arith.constant 0 : i32
    return %c0_i32, %c0_i32_0 : i32, i32
  }
  func.func @transform_4(%arg0: i32) -> (i32, i32) {
    %c0_i32 = arith.constant 0 : i32
    %c0_i32_0 = arith.constant 0 : i32
    %c0_i32_1 = arith.constant 0 : i32
    return %c0_i32, %c0_i32_0 : i32, i32
  }
  func.func @transform_5(%arg0: i32) -> (i32, i32, i32) {
    %c0_i32 = arith.constant 0 : i32
    %c0_i32_0 = arith.constant 0 : i32
    %c0_i32_1 = arith.constant 0 : i32
    return %arg0, %c0_i32, %c0_i32_0 : i32, i32, i32
  }
}

</mosaic_0001>

<llo_original>
// kernel: tpu_custom_call.1
$region0: #{tpu_custom_call.1}
  #allocation0 [shape = 'u32[]', space=smem, size = 0x4, offset = 0x4, fixed_abs, tag = 'smem constant byte address 0x4 - core index']
  #allocation1 [shape = 'u32[72,128]{1,0:T(1,128)}', space=vmem, size = 0x9000, scoped, tag = 'internal scratch']
  %s0 = inlined_call_operand.vmem [shape: f32[2,1,512], index: 0, kind: input, shape index: {}]
  %s1 = inlined_call_operand.vmem [shape: f32[32,2], index: 1, kind: input, shape index: {}]
  %s2 = inlined_call_operand.vmem [shape: f32[2,32], index: 2, kind: input, shape index: {}]
  %s3 = inlined_call_operand.vmem [shape: f32[512,32], index: 3, kind: input, shape index: {}]
  %s4 = inlined_call_operand.vmem [shape: f32[32,512], index: 4, kind: input, shape index: {}]
  %s5 = inlined_call_operand.hbm [shape: f32[2,1,512], index: 5, kind: output, shape index: {}]
  %s6 = sld [smem:[#allocation0]]
  $region53: #{tpu_custom_call.1} parent=0
    _
  %s8 = ssub.s32 1, %s6
  %s9 = scalar_select 0, %s8, %s6
  $region1: #{tpu_custom_call.1} parent=0
    #allocation2 [shape = 'u8[4096]{0}', space=vmem, size = 0x1000, scoped, tag = 'output window, operand 0']
    #allocation3 [shape = 's32[2]{0}', space=sflag, size = 0x8, scoped, tag = 'scoped memory for tpu_custom_call.1']
    %10 = vsyncpa [#allocation3], 0
    %s11 = scalar_lea.sflag [#allocation3], 1
    %12 = vsyncpa %s11, 0
    loop: start=0, step=1, limit=4
    $region2: #{tpu_custom_call.1} parent=1 // loop_pre_header
      _
    $region3: #{tpu_custom_call.1} parent=1 // loop_header
      %s14 = sphi 0, %s18
      %p15 = scmp.ge.s32.totalorder %s14, 4
      %s24 = sphi 0, %s26
      %s27 = sphi 0, %s24
      %s28 = sphi 0, %s27
      %s44 = sphi 0, %s28
      %s48 = sphi 0, %s48
      %s50 = sphi 0, %s48
      %s51 = sphi 0, %s50
      %s65 = sphi 0, %s51
      %s69 = sphi 0, %s69
      %s71 = sphi 0, %s69
      %s72 = sphi 0, %s71
      %s86 = sphi 0, %s72
      %s90 = sphi 0, %s90
      %s92 = sphi 0, %s90
      %s93 = sphi 0, %s92
      %s107 = sphi 0, %s93
      %s111 = sphi 0, %s111
      %s113 = sphi 0, %s111
      %s114 = sphi 0, %s113
      %s128 = sphi 0, %s114
      %s134 = sphi 0, %s136
      %s137 = sphi 0, %s134
      %s138 = sphi 0, %s137
      %s154 = sphi 0, %s138
    $region4: #{tpu_custom_call.1} parent=1 // loop_header_branch
      %17 = sbr.rel (%p15) target = $region8
    $region5: #{tpu_custom_call.1} parent=1 // loop_body
      %s19 = ssub.s32 %s14, 1
      %s20 = ssub.s32 %s14, 2
      %s21 = sadd.s32 %s14, 1
      %s22 = ssub.s32 %s14, %s21
      %p23 = scmp.eq.s32.totalorder %s22, 0
      %s25 = sadd.s32 %s24, 1
      %s26 = scalar_select %p23, %s24, %s25
      %p29 = pneg %p23
      %p30 = scmp.eq.s32.totalorder %s14, 1
      %p31 = por %p29, %p30
      %p32 = scmp.ne.s32.totalorder %s24, %s27
      %p33 = scmp.eq.s32.totalorder %s14, 0
      %p34 = por %p32, %p33
      %p35 = scmp.ne.s32.totalorder %s24, %s27
      %p36 = scmp.eq.s32.totalorder %s19, 1
      %p37 = por %p35, %p36
      %p38 = scmp.ne.s32.totalorder %s27, %s28
      %p39 = scmp.eq.s32.totalorder %s19, 0
      %p40 = por %p38, %p39
      %p41 = scmp.ne.s32.totalorder %s27, %s28
      %p42 = scmp.eq.s32.totalorder %s20, 1
      %p43 = por %p41, %p42
      %p45 = scmp.ne.s32.totalorder %s28, %s44
      %p46 = scmp.eq.s32.totalorder %s20, 0
      %p47 = por %p45, %p46
      %s49 = sadd.s32 %s48, 1
      %p52 = scmp.eq.s32.totalorder %s14, 1
      %p53 = scmp.ne.s32.totalorder %s48, %s50
      %p54 = scmp.eq.s32.totalorder %s14, 0
      %p55 = por %p53, %p54
      %p56 = scmp.ne.s32.totalorder %s48, %s50
      %p57 = scmp.eq.s32.totalorder %s19, 1
      %p58 = por %p56, %p57
      %p59 = scmp.ne.s32.totalorder %s50, %s51
      %p60 = scmp.eq.s32.totalorder %s19, 0
      %p61 = por %p59, %p60
      %p62 = scmp.ne.s32.totalorder %s50, %s51
      %p63 = scmp.eq.s32.totalorder %s20, 1
      %p64 = por %p62, %p63
      %p66 = scmp.ne.s32.totalorder %s51, %s65
      %p67 = scmp.eq.s32.totalorder %s20, 0
      %p68 = por %p66, %p67
      %s70 = sadd.s32 %s69, 1
      %p73 = scmp.eq.s32.totalorder %s14, 1
      %p74 = scmp.ne.s32.totalorder %s69, %s71
      %p75 = scmp.eq.s32.totalorder %s14, 0
      %p76 = por %p74, %p75
      %p77 = scmp.ne.s32.totalorder %s69, %s71
      %p78 = scmp.eq.s32.totalorder %s19, 1
      %p79 = por %p77, %p78
      %p80 = scmp.ne.s32.totalorder %s71, %s72
      %p81 = scmp.eq.s32.totalorder %s19, 0
      %p82 = por %p80, %p81
      %p83 = scmp.ne.s32.totalorder %s71, %s72
      %p84 = scmp.eq.s32.totalorder %s20, 1
      %p85 = por %p83, %p84
      %p87 = scmp.ne.s32.totalorder %s72, %s86
      %p88 = scmp.eq.s32.totalorder %s20, 0
      %p89 = por %p87, %p88
      %s91 = sadd.s32 %s90, 1
      %p94 = scmp.eq.s32.totalorder %s14, 1
      %p95 = scmp.ne.s32.totalorder %s90, %s92
      %p96 = scmp.eq.s32.totalorder %s14, 0
      %p97 = por %p95, %p96
      %p98 = scmp.ne.s32.totalorder %s90, %s92
      %p99 = scmp.eq.s32.totalorder %s19, 1
      %p100 = por %p98, %p99
      %p101 = scmp.ne.s32.totalorder %s92, %s93
      %p102 = scmp.eq.s32.totalorder %s19, 0
      %p103 = por %p101, %p102
      %p104 = scmp.ne.s32.totalorder %s92, %s93
      %p105 = scmp.eq.s32.totalorder %s20, 1
      %p106 = por %p104, %p105
      %p108 = scmp.ne.s32.totalorder %s93, %s107
      %p109 = scmp.eq.s32.totalorder %s20, 0
      %p110 = por %p108, %p109
      %s112 = sadd.s32 %s111, 1
      %p115 = scmp.eq.s32.totalorder %s14, 1
      %p116 = scmp.ne.s32.totalorder %s111, %s113
      %p117 = scmp.eq.s32.totalorder %s14, 0
      %p118 = por %p116, %p117
      %p119 = scmp.ne.s32.totalorder %s111, %s113
      %p120 = scmp.eq.s32.totalorder %s19, 1
      %p121 = por %p119, %p120
      %p122 = scmp.ne.s32.totalorder %s113, %s114
      %p123 = scmp.eq.s32.totalorder %s19, 0
      %p124 = por %p122, %p123
      %p125 = scmp.ne.s32.totalorder %s113, %s114
      %p126 = scmp.eq.s32.totalorder %s20, 1
      %p127 = por %p125, %p126
      %p129 = scmp.ne.s32.totalorder %s114, %s128
      %p130 = scmp.eq.s32.totalorder %s20, 0
      %p131 = por %p129, %p130
      %s132 = ssub.s32 %s14, %s21
      %p133 = scmp.eq.s32.totalorder %s132, 0
      %s135 = sadd.s32 %s134, 1
      %s136 = scalar_select %p133, %s134, %s135
      %p139 = pneg %p133
      %p140 = scmp.eq.s32.totalorder %s14, 1
      %p141 = por %p139, %p140
      %p142 = scmp.ne.s32.totalorder %s134, %s137
      %p143 = scmp.eq.s32.totalorder %s14, 0
      %p144 = por %p142, %p143
      %p145 = scmp.ne.s32.totalorder %s134, %s137
      %p146 = scmp.eq.s32.totalorder %s19, 1
      %p147 = por %p145, %p146
      %p148 = scmp.ne.s32.totalorder %s137, %s138
      %p149 = scmp.eq.s32.totalorder %s19, 0
      %p150 = por %p148, %p149
      %p151 = scmp.ne.s32.totalorder %s137, %s138
      %p152 = scmp.eq.s32.totalorder %s20, 1
      %p153 = por %p151, %p152
      %p155 = scmp.ne.s32.totalorder %s138, %s154
      %p156 = scmp.eq.s32.totalorder %s20, 0
      %p157 = por %p155, %p156
      %p158 = scmp.le.s32.totalorder 1, %s14
      %p159 = scmp.lt.s32.totalorder %s14, 3
      %p160 = pnand %p158, %p159
      %p161 = pneg %p160
      // Predicated region
      $region9: #{tpu_custom_call.1} parent=5 // pred_check
        _
      $region10: #{tpu_custom_call.1} parent=5 // pred_check_branch
        %163 = sbr.rel (%p160) target = $region12
      $region11: #{tpu_custom_call.1} parent=5 // pred_region
        %s164 = ssub.s32 %s14, 1
        // Predicated region
        $region13: #{tpu_custom_call.1} parent=11 // pred_check
          %p165 = pneg %p61
        $region14: #{tpu_custom_call.1} parent=11 // pred_check_branch
          %167 = sbr.rel (%p165) target = $region16
        $region15: #{tpu_custom_call.1} parent=11 // pred_region
          _
        $region16: #{tpu_custom_call.1} parent=11 // pred_fallthru
          _
        // Predicated region
        $region17: #{tpu_custom_call.1} parent=11 // pred_check
          %p168 = pneg %p82
        $region18: #{tpu_custom_call.1} parent=11 // pred_check_branch
          %170 = sbr.rel (%p168) target = $region20
        $region19: #{tpu_custom_call.1} parent=11 // pred_region
          _
        $region20: #{tpu_custom_call.1} parent=11 // pred_fallthru
          _
        // Predicated region
        $region21: #{tpu_custom_call.1} parent=11 // pred_check
          %p171 = pneg %p103
        $region22: #{tpu_custom_call.1} parent=11 // pred_check_branch
          %173 = sbr.rel (%p171) target = $region24
        $region23: #{tpu_custom_call.1} parent=11 // pred_region
          _
        $region24: #{tpu_custom_call.1} parent=11 // pred_fallthru
          _
        // Predicated region
        $region25: #{tpu_custom_call.1} parent=11 // pred_check
          %p174 = pneg %p124
        $region26: #{tpu_custom_call.1} parent=11 // pred_check_branch
          %176 = sbr.rel (%p174) target = $region28
        $region27: #{tpu_custom_call.1} parent=11 // pred_region
          _
        $region28: #{tpu_custom_call.1} parent=11 // pred_fallthru
          _
      $region12: #{tpu_custom_call.1} parent=5 // pred_fallthru
        _
      %p177 = scmp.lt.s32.totalorder %s14, 2
      // Predicated region
      $region29: #{tpu_custom_call.1} parent=5 // pred_check
        %p178 = pneg %p177
      $region30: #{tpu_custom_call.1} parent=5 // pred_check_branch
        %180 = sbr.rel (%p178) target = $region32
      $region31: #{tpu_custom_call.1} parent=5 // pred_region
        // Predicated region
        $region33: #{tpu_custom_call.1} parent=31 // pred_check
          %p181 = pneg %p34
        $region34: #{tpu_custom_call.1} parent=31 // pred_check_branch
          %183 = sbr.rel (%p181) target = $region36
        $region35: #{tpu_custom_call.1} parent=31 // pred_region
          %p184 = scmp.lt.s32.totalorder %s14, 1
          %s185 = scalar_select %p184, %s14, 1
          %s186 = smul.addr %s185, 4
          %s187 = scalar_lea.vmem %s0, %s186
        $region36: #{tpu_custom_call.1} parent=31 // pred_fallthru
          _
      $region32: #{tpu_custom_call.1} parent=5 // pred_fallthru
        _
      %p188 = scmp.le.s32.totalorder 1, %s14
      %p189 = scmp.lt.s32.totalorder %s14, 3
      %p190 = pnand %p188, %p189
      %p191 = pneg %p190
      // Predicated region
      $region37: #{tpu_custom_call.1} parent=5 // pred_check
        _
      $region38: #{tpu_custom_call.1} parent=5 // pred_check_branch
        %193 = sbr.rel (%p190) target = $region40
      $region39: #{tpu_custom_call.1} parent=5 // pred_region
        %s194 = ssub.s32 %s14, 1
        %p195 = scmp.lt.s32.totalorder %s19, 1
        %s196 = scalar_select %p195, %s19, 1
        %s197 = smul.addr %s196, 4
        %s198 = scalar_lea.vmem %s0, %s197
        %p199 = pneg %p40
        %p200 = pneg %p37
        %p201 = pneg %p61
        %p202 = pneg %p58
        %p203 = pneg %p82
        %p204 = pneg %p79
        %p205 = pneg %p103
        %p206 = pneg %p100
        %p207 = pneg %p124
        %p208 = pneg %p121
        %p209 = pneg %p150
        %p210 = pneg %p147
        %s211 = sand.u32 %s137, 1
        %s212 = scalar_lea.sflag [#allocation3], %s211
        %s213 = sand.u32 %s137, 1
        %s214 = smul.addr %s213, 4
        %s215 = scalar_lea.vmem [#allocation2], %s214
        %p216 = scmp.lt.s32.totalorder %s19, 1
        %s217 = scalar_select %p216, %s19, 1
        %s218 = smul.addr %s217, 4
        %s219 = scalar_lea.vmem %s0, %s218
        %v220 = vld [vmem:[%s219] sm:$0xf]
        %v221 = vld [vmem:[%s3] sm:$0xff]
        %v222 = vld [vmem:[%s3 + $0x8] sm:$0xff]
        %v223 = vld [vmem:[%s3 + $0x10] sm:$0xff]
        %v224 = vld [vmem:[%s3 + $0x18] sm:$0xff]
        %v225 = vld [vmem:[%s3 + $0x20] sm:$0xff]
        %v226 = vld [vmem:[%s3 + $0x28] sm:$0xff]
        %v227 = vld [vmem:[%s3 + $0x30] sm:$0xff]
        %v228 = vld [vmem:[%s3 + $0x38] sm:$0xff]
        %v229 = vld [vmem:[%s3 + $0x40] sm:$0xff]
        %v230 = vld [vmem:[%s3 + $0x48] sm:$0xff]
        %v231 = vld [vmem:[%s3 + $0x50] sm:$0xff]
        %v232 = vld [vmem:[%s3 + $0x58] sm:$0xff]
        %v233 = vld [vmem:[%s3 + $0x60] sm:$0xff]
        %v234 = vld [vmem:[%s3 + $0x68] sm:$0xff]
        %v235 = vld [vmem:[%s3 + $0x70] sm:$0xff]
        %v236 = vld [vmem:[%s3 + $0x78] sm:$0xff]
        %v237 = vld [vmem:[%s3 + $0x80] sm:$0xff]
        %v238 = vld [vmem:[%s3 + $0x88] sm:$0xff]
        %v239 = vld [vmem:[%s3 + $0x90] sm:$0xff]
        %v240 = vld [vmem:[%s3 + $0x98] sm:$0xff]
        %v241 = vld [vmem:[%s3 + $0xa0] sm:$0xff]
        %v242 = vld [vmem:[%s3 + $0xa8] sm:$0xff]
        %v243 = vld [vmem:[%s3 + $0xb0] sm:$0xff]
        %v244 = vld [vmem:[%s3 + $0xb8] sm:$0xff]
        %v245 = vld [vmem:[%s3 + $0xc0] sm:$0xff]
        %v246 = vld [vmem:[%s3 + $0xc8] sm:$0xff]
        %v247 = vld [vmem:[%s3 + $0xd0] sm:$0xff]
        %v248 = vld [vmem:[%s3 + $0xd8] sm:$0xff]
        %v249 = vld [vmem:[%s3 + $0xe0] sm:$0xff]
        %v250 = vld [vmem:[%s3 + $0xe8] sm:$0xff]
        %v251 = vld [vmem:[%s3 + $0xf0] sm:$0xff]
        %v252 = vld [vmem:[%s3 + $0xf8] sm:$0xff]
        %v253 = vld [vmem:[%s3 + $0x100] sm:$0xff]
        %v254 = vld [vmem:[%s3 + $0x108] sm:$0xff]
        %v255 = vld [vmem:[%s3 + $0x110] sm:$0xff]
        %v256 = vld [vmem:[%s3 + $0x118] sm:$0xff]
        %v257 = vld [vmem:[%s3 + $0x120] sm:$0xff]
        %v258 = vld [vmem:[%s3 + $0x128] sm:$0xff]
        %v259 = vld [vmem:[%s3 + $0x130] sm:$0xff]
        %v260 = vld [vmem:[%s3 + $0x138] sm:$0xff]
        %v261 = vld [vmem:[%s3 + $0x140] sm:$0xff]
        %v262 = vld [vmem:[%s3 + $0x148] sm:$0xff]
        %v263 = vld [vmem:[%s3 + $0x150] sm:$0xff]
        %v264 = vld [vmem:[%s3 + $0x158] sm:$0xff]
        %v265 = vld [vmem:[%s3 + $0x160] sm:$0xff]
        %v266 = vld [vmem:[%s3 + $0x168] sm:$0xff]
        %v267 = vld [vmem:[%s3 + $0x170] sm:$0xff]
        %v268 = vld [vmem:[%s3 + $0x178] sm:$0xff]
        %v269 = vld [vmem:[%s3 + $0x180] sm:$0xff]
        %v270 = vld [vmem:[%s3 + $0x188] sm:$0xff]
        %v271 = vld [vmem:[%s3 + $0x190] sm:$0xff]
        %v272 = vld [vmem:[%s3 + $0x198] sm:$0xff]
        %v273 = vld [vmem:[%s3 + $0x1a0] sm:$0xff]
        %v274 = vld [vmem:[%s3 + $0x1a8] sm:$0xff]
        %v275 = vld [vmem:[%s3 + $0x1b0] sm:$0xff]
        %v276 = vld [vmem:[%s3 + $0x1b8] sm:$0xff]
        %v277 = vld [vmem:[%s3 + $0x1c0] sm:$0xff]
        %v278 = vld [vmem:[%s3 + $0x1c8] sm:$0xff]
        %v279 = vld [vmem:[%s3 + $0x1d0] sm:$0xff]
        %v280 = vld [vmem:[%s3 + $0x1d8] sm:$0xff]
        %v281 = vld [vmem:[%s3 + $0x1e0] sm:$0xff]
        %v282 = vld [vmem:[%s3 + $0x1e8] sm:$0xff]
        %v283 = vld [vmem:[%s3 + $0x1f0] sm:$0xff]
        %v284 = vld [vmem:[%s3 + $0x1f8] sm:$0xff]
        %v286 = vperm.slane %v220, 0
        %v287 = vperm.slane %v220, 1
        %v288 = vperm.slane %v220, 2
        %v289 = vperm.slane %v220, 3
        %v294 = vand.u32 %v236, 4294901760
        %295 = vmatpush.msra.mxu0 %v294
        %v296 = vand.u32 %v235, 4294901760
        %297 = vmatpush.msra.mxu0 %v296
        %v298 = vand.u32 %v234, 4294901760
        %299 = vmatpush.msra.mxu0 %v298
        %v300 = vand.u32 %v233, 4294901760
        %301 = vmatpush.msra.mxu0 %v300
        %v302 = vand.u32 %v232, 4294901760
        %303 = vmatpush.msra.mxu0 %v302
        %v304 = vand.u32 %v231, 4294901760
        %305 = vmatpush.msra.mxu0 %v304
        %v306 = vand.u32 %v230, 4294901760
        %307 = vmatpush.msra.mxu0 %v306
        %v308 = vand.u32 %v229, 4294901760
        %309 = vmatpush.msra.mxu0 %v308
        %v310 = vand.u32 %v228, 4294901760
        %311 = vmatpush.msra.mxu0 %v310
        %v312 = vand.u32 %v227, 4294901760
        %313 = vmatpush.msra.mxu0 %v312
        %v314 = vand.u32 %v226, 4294901760
        %315 = vmatpush.msra.mxu0 %v314
        %v316 = vand.u32 %v225, 4294901760
        %317 = vmatpush.msra.mxu0 %v316
        %v318 = vand.u32 %v224, 4294901760
        %319 = vmatpush.msra.mxu0 %v318
        %v320 = vand.u32 %v223, 4294901760
        %321 = vmatpush.msra.mxu0 %v320
        %v322 = vand.u32 %v222, 4294901760
        %323 = vmatpush.msra.mxu0 %v322
        %v324 = vand.u32 %v221, 4294901760
        %325 = vmatpush.msra.mxu0 %v324
        %v326 = vand.u32 %v286, 4294901760
        %v327 = vsub.f32 %v286, %v326
        %v328 = vand.u32 %v327, 4294901760
        %v329 = vsub.f32 %v327, %v328
        %v330 = vand.u32 %v329, 4294901760
        %331 = vmatmul.f32.gmra.mxu0 %v330
        %v332 = vpop.f32.mrf.mxu0
        %v333 = vadd.f32 0.0, %v332
        %334 = vdwg.mxu0
        %v335 = vand.u32 %v236, 4294901760
        %v336 = vsub.f32 %v236, %v335
        %v337 = vand.u32 %v336, 4294901760
        %v338 = vsub.f32 %v336, %v337
        %v339 = vand.u32 %v338, 4294901760
        %340 = vmatpush.msra.mxu0 %v339
        %v341 = vand.u32 %v235, 4294901760
        %v342 = vsub.f32 %v235, %v341
        %v343 = vand.u32 %v342, 4294901760
        %v344 = vsub.f32 %v342, %v343
        %v345 = vand.u32 %v344, 4294901760
        %346 = vmatpush.msra.mxu0 %v345
        %v347 = vand.u32 %v234, 4294901760
        %v348 = vsub.f32 %v234, %v347
        %v349 = vand.u32 %v348, 4294901760
        %v350 = vsub.f32 %v348, %v349
        %v351 = vand.u32 %v350, 4294901760
        %352 = vmatpush.msra.mxu0 %v351
        %v353 = vand.u32 %v233, 4294901760
        %v354 = vsub.f32 %v233, %v353
        %v355 = vand.u32 %v354, 4294901760
        %v356 = vsub.f32 %v354, %v355
        %v357 = vand.u32 %v356, 4294901760
        %358 = vmatpush.msra.mxu0 %v357
        %v359 = vand.u32 %v232, 4294901760
        %v360 = vsub.f32 %v232, %v359
        %v361 = vand.u32 %v360, 4294901760
        %v362 = vsub.f32 %v360, %v361
        %v363 = vand.u32 %v362, 4294901760
        %364 = vmatpush.msra.mxu0 %v363
        %v365 = vand.u32 %v231, 4294901760
        %v366 = vsub.f32 %v231, %v365
        %v367 = vand.u32 %v366, 4294901760
        %v368 = vsub.f32 %v366, %v367
        %v369 = vand.u32 %v368, 4294901760
        %370 = vmatpush.msra.mxu0 %v369
        %v371 = vand.u32 %v230, 4294901760
        %v372 = vsub.f32 %v230, %v371
        %v373 = vand.u32 %v372, 4294901760
        %v374 = vsub.f32 %v372, %v373
        %v375 = vand.u32 %v374, 4294901760
        %376 = vmatpush.msra.mxu0 %v375
        %v377 = vand.u32 %v229, 4294901760
        %v378 = vsub.f32 %v229, %v377
        %v379 = vand.u32 %v378, 4294901760
        %v380 = vsub.f32 %v378, %v379
        %v381 = vand.u32 %v380, 4294901760
        %382 = vmatpush.msra.mxu0 %v381
        %v383 = vand.u32 %v228, 4294901760
        %v384 = vsub.f32 %v228, %v383
        %v385 = vand.u32 %v384, 4294901760
        %v386 = vsub.f32 %v384, %v385
        %v387 = vand.u32 %v386, 4294901760
        %388 = vmatpush.msra.mxu0 %v387
        %v389 = vand.u32 %v227, 4294901760
        %v390 = vsub.f32 %v227, %v389
        %v391 = vand.u32 %v390, 4294901760
        %v392 = vsub.f32 %v390, %v391
        %v393 = vand.u32 %v392, 4294901760
        %394 = vmatpush.msra.mxu0 %v393
        %v395 = vand.u32 %v226, 4294901760
        %v396 = vsub.f32 %v226, %v395
        %v397 = vand.u32 %v396, 4294901760
        %v398 = vsub.f32 %v396, %v397
        %v399 = vand.u32 %v398, 4294901760
        %400 = vmatpush.msra.mxu0 %v399
        %v401 = vand.u32 %v225, 4294901760
        %v402 = vsub.f32 %v225, %v401
        %v403 = vand.u32 %v402, 4294901760
        %v404 = vsub.f32 %v402, %v403
        %v405 = vand.u32 %v404, 4294901760
        %406 = vmatpush.msra.mxu0 %v405
        %v407 = vand.u32 %v224, 4294901760
        %v408 = vsub.f32 %v224, %v407
        %v409 = vand.u32 %v408, 4294901760
        %v410 = vsub.f32 %v408, %v409
        %v411 = vand.u32 %v410, 4294901760
        %412 = vmatpush.msra.mxu0 %v411
        %v413 = vand.u32 %v223, 4294901760
        %v414 = vsub.f32 %v223, %v413
        %v415 = vand.u32 %v414, 4294901760
        %v416 = vsub.f32 %v414, %v415
        %v417 = vand.u32 %v416, 4294901760
        %418 = vmatpush.msra.mxu0 %v417
        %v419 = vand.u32 %v222, 4294901760
        %v420 = vsub.f32 %v222, %v419
        %v421 = vand.u32 %v420, 4294901760
        %v422 = vsub.f32 %v420, %v421
        %v423 = vand.u32 %v422, 4294901760
        %424 = vmatpush.msra.mxu0 %v423
        %v425 = vand.u32 %v221, 4294901760
        %v426 = vsub.f32 %v221, %v425
        %v427 = vand.u32 %v426, 4294901760
        %v428 = vsub.f32 %v426, %v427
        %v429 = vand.u32 %v428, 4294901760
        %430 = vmatpush.msra.mxu0 %v429
        %v431 = vand.u32 %v286, 4294901760
        %432 = vmatmul.f32.gmra.mxu0 %v431
        %v433 = vpop.f32.mrf.mxu0
        %v434 = vadd.f32 %v333, %v433
        %435 = vdwg.mxu0
        %v436 = vand.u32 %v236, 4294901760
        %v437 = vsub.f32 %v236, %v436
        %438 = vmatpush.msra.mxu0 %v437
        %v439 = vand.u32 %v235, 4294901760
        %v440 = vsub.f32 %v235, %v439
        %441 = vmatpush.msra.mxu0 %v440
        %v442 = vand.u32 %v234, 4294901760
        %v443 = vsub.f32 %v234, %v442
        %444 = vmatpush.msra.mxu0 %v443
        %v445 = vand.u32 %v233, 4294901760
        %v446 = vsub.f32 %v233, %v445
        %447 = vmatpush.msra.mxu0 %v446
        %v448 = vand.u32 %v232, 4294901760
        %v449 = vsub.f32 %v232, %v448
        %450 = vmatpush.msra.mxu0 %v449
        %v451 = vand.u32 %v231, 4294901760
        %v452 = vsub.f32 %v231, %v451
        %453 = vmatpush.msra.mxu0 %v452
        %v454 = vand.u32 %v230, 4294901760
        %v455 = vsub.f32 %v230, %v454
        %456 = vmatpush.msra.mxu0 %v455
        %v457 = vand.u32 %v229, 4294901760
        %v458 = vsub.f32 %v229, %v457
        %459 = vmatpush.msra.mxu0 %v458
        %v460 = vand.u32 %v228, 4294901760
        %v461 = vsub.f32 %v228, %v460
        %462 = vmatpush.msra.mxu0 %v461
        %v463 = vand.u32 %v227, 4294901760
        %v464 = vsub.f32 %v227, %v463
        %465 = vmatpush.msra.mxu0 %v464
        %v466 = vand.u32 %v226, 4294901760
        %v467 = vsub.f32 %v226, %v466
        %468 = vmatpush.msra.mxu0 %v467
        %v469 = vand.u32 %v225, 4294901760
        %v470 = vsub.f32 %v225, %v469
        %471 = vmatpush.msra.mxu0 %v470
        %v472 = vand.u32 %v224, 4294901760
        %v473 = vsub.f32 %v224, %v472
        %474 = vmatpush.msra.mxu0 %v473
        %v475 = vand.u32 %v223, 4294901760
        %v476 = vsub.f32 %v223, %v475
        %477 = vmatpush.msra.mxu0 %v476
        %v478 = vand.u32 %v222, 4294901760
        %v479 = vsub.f32 %v222, %v478
        %480 = vmatpush.msra.mxu0 %v479
        %v481 = vand.u32 %v221, 4294901760
        %v482 = vsub.f32 %v221, %v481
        %483 = vmatpush.msra.mxu0 %v482
        %v484 = vand.u32 %v286, 4294901760
        %v485 = vsub.f32 %v286, %v484
        %486 = vmatmul.f32.gmra.mxu0 %v485
        %v487 = vpop.f32.mrf.mxu0
        %v488 = vadd.f32 %v434, %v487
        %489 = vdwg.mxu0
        %v490 = vand.u32 %v236, 4294901760
        %491 = vmatpush.msra.mxu0 %v490
        %v492 = vand.u32 %v235, 4294901760
        %493 = vmatpush.msra.mxu0 %v492
        %v494 = vand.u32 %v234, 4294901760
        %495 = vmatpush.msra.mxu0 %v494
        %v496 = vand.u32 %v233, 4294901760
        %497 = vmatpush.msra.mxu0 %v496
        %v498 = vand.u32 %v232, 4294901760
        %499 = vmatpush.msra.mxu0 %v498
        %v500 = vand.u32 %v231, 4294901760
        %501 = vmatpush.msra.mxu0 %v500
        %v502 = vand.u32 %v230, 4294901760
        %503 = vmatpush.msra.mxu0 %v502
        %v504 = vand.u32 %v229, 4294901760
        %505 = vmatpush.msra.mxu0 %v504
        %v506 = vand.u32 %v228, 4294901760
        %507 = vmatpush.msra.mxu0 %v506
        %v508 = vand.u32 %v227, 4294901760
        %509 = vmatpush.msra.mxu0 %v508
        %v510 = vand.u32 %v226, 4294901760
        %511 = vmatpush.msra.mxu0 %v510
        %v512 = vand.u32 %v225, 4294901760
        %513 = vmatpush.msra.mxu0 %v512
        %v514 = vand.u32 %v224, 4294901760
        %515 = vmatpush.msra.mxu0 %v514
        %v516 = vand.u32 %v223, 4294901760
        %517 = vmatpush.msra.mxu0 %v516
        %v518 = vand.u32 %v222, 4294901760
        %519 = vmatpush.msra.mxu0 %v518
        %v520 = vand.u32 %v221, 4294901760
        %521 = vmatpush.msra.mxu0 %v520
        %v522 = vand.u32 %v286, 4294901760
        %v523 = vsub.f32 %v286, %v522
        %v524 = vand.u32 %v523, 4294901760
        %525 = vmatmul.f32.gmra.mxu0 %v524
        %v526 = vpop.f32.mrf.mxu0
        %v527 = vadd.f32 %v488, %v526
        %528 = vdwg.mxu0
        %v529 = vand.u32 %v236, 4294901760
        %v530 = vsub.f32 %v236, %v529
        %v531 = vand.u32 %v530, 4294901760
        %532 = vmatpush.msra.mxu0 %v531
        %v533 = vand.u32 %v235, 4294901760
        %v534 = vsub.f32 %v235, %v533
        %v535 = vand.u32 %v534, 4294901760
        %536 = vmatpush.msra.mxu0 %v535
        %v537 = vand.u32 %v234, 4294901760
        %v538 = vsub.f32 %v234, %v537
        %v539 = vand.u32 %v538, 4294901760
        %540 = vmatpush.msra.mxu0 %v539
        %v541 = vand.u32 %v233, 4294901760
        %v542 = vsub.f32 %v233, %v541
        %v543 = vand.u32 %v542, 4294901760
        %544 = vmatpush.msra.mxu0 %v543
        %v545 = vand.u32 %v232, 4294901760
        %v546 = vsub.f32 %v232, %v545
        %v547 = vand.u32 %v546, 4294901760
        %548 = vmatpush.msra.mxu0 %v547
        %v549 = vand.u32 %v231, 4294901760
        %v550 = vsub.f32 %v231, %v549
        %v551 = vand.u32 %v550, 4294901760
        %552 = vmatpush.msra.mxu0 %v551
        %v553 = vand.u32 %v230, 4294901760
        %v554 = vsub.f32 %v230, %v553
        %v555 = vand.u32 %v554, 4294901760
        %556 = vmatpush.msra.mxu0 %v555
        %v557 = vand.u32 %v229, 4294901760
        %v558 = vsub.f32 %v229, %v557
        %v559 = vand.u32 %v558, 4294901760
        %560 = vmatpush.msra.mxu0 %v559
        %v561 = vand.u32 %v228, 4294901760
        %v562 = vsub.f32 %v228, %v561
        %v563 = vand.u32 %v562, 4294901760
        %564 = vmatpush.msra.mxu0 %v563
        %v565 = vand.u32 %v227, 4294901760
        %v566 = vsub.f32 %v227, %v565
        %v567 = vand.u32 %v566, 4294901760
        %568 = vmatpush.msra.mxu0 %v567
        %v569 = vand.u32 %v226, 4294901760
        %v570 = vsub.f32 %v226, %v569
        %v571 = vand.u32 %v570, 4294901760
        %572 = vmatpush.msra.mxu0 %v571
        %v573 = vand.u32 %v225, 4294901760
        %v574 = vsub.f32 %v225, %v573
        %v575 = vand.u32 %v574, 4294901760
        %576 = vmatpush.msra.mxu0 %v575
        %v577 = vand.u32 %v224, 4294901760
        %v578 = vsub.f32 %v224, %v577
        %v579 = vand.u32 %v578, 4294901760
        %580 = vmatpush.msra.mxu0 %v579
        %v581 = vand.u32 %v223, 4294901760
        %v582 = vsub.f32 %v223, %v581
        %v583 = vand.u32 %v582, 4294901760
        %584 = vmatpush.msra.mxu0 %v583
        %v585 = vand.u32 %v222, 4294901760
        %v586 = vsub.f32 %v222, %v585
        %v587 = vand.u32 %v586, 4294901760
        %588 = vmatpush.msra.mxu0 %v587
        %v589 = vand.u32 %v221, 4294901760
        %v590 = vsub.f32 %v221, %v589
        %v591 = vand.u32 %v590, 4294901760
        %592 = vmatpush.msra.mxu0 %v591
        %v593 = vand.u32 %v286, 4294901760
        %594 = vmatmul.f32.gmra.mxu0 %v593
        %v595 = vpop.f32.mrf.mxu0
        %v596 = vadd.f32 %v527, %v595
        %597 = vdwg.mxu0
        %v598 = vand.u32 %v236, 4294901760
        %599 = vmatpush.msra.mxu0 %v598
        %v600 = vand.u32 %v235, 4294901760
        %601 = vmatpush.msra.mxu0 %v600
        %v602 = vand.u32 %v234, 4294901760
        %603 = vmatpush.msra.mxu0 %v602
        %v604 = vand.u32 %v233, 4294901760
        %605 = vmatpush.msra.mxu0 %v604
        %v606 = vand.u32 %v232, 4294901760
        %607 = vmatpush.msra.mxu0 %v606
        %v608 = vand.u32 %v231, 4294901760
        %609 = vmatpush.msra.mxu0 %v608
        %v610 = vand.u32 %v230, 4294901760
        %611 = vmatpush.msra.mxu0 %v610
        %v612 = vand.u32 %v229, 4294901760
        %613 = vmatpush.msra.mxu0 %v612
        %v614 = vand.u32 %v228, 4294901760
        %615 = vmatpush.msra.mxu0 %v614
        %v616 = vand.u32 %v227, 4294901760
        %617 = vmatpush.msra.mxu0 %v616
        %v618 = vand.u32 %v226, 4294901760
        %619 = vmatpush.msra.mxu0 %v618
        %v620 = vand.u32 %v225, 4294901760
        %621 = vmatpush.msra.mxu0 %v620
        %v622 = vand.u32 %v224, 4294901760
        %623 = vmatpush.msra.mxu0 %v622
        %v624 = vand.u32 %v223, 4294901760
        %625 = vmatpush.msra.mxu0 %v624
        %v626 = vand.u32 %v222, 4294901760
        %627 = vmatpush.msra.mxu0 %v626
        %v628 = vand.u32 %v221, 4294901760
        %629 = vmatpush.msra.mxu0 %v628
        %v630 = vand.u32 %v286, 4294901760
        %631 = vmatmul.f32.gmra.mxu0 %v630
        %v632 = vpop.f32.mrf.mxu0
        %v633 = vadd.f32 %v596, %v632
        %634 = vdwg.mxu0
        %v635 = vand.u32 %v252, 4294901760
        %636 = vmatpush.msra.mxu0 %v635
        %v637 = vand.u32 %v251, 4294901760
        %638 = vmatpush.msra.mxu0 %v637
        %v639 = vand.u32 %v250, 4294901760
        %640 = vmatpush.msra.mxu0 %v639
        %v641 = vand.u32 %v249, 4294901760
        %642 = vmatpush.msra.mxu0 %v641
        %v643 = vand.u32 %v248, 4294901760
        %644 = vmatpush.msra.mxu0 %v643
        %v645 = vand.u32 %v247, 4294901760
        %646 = vmatpush.msra.mxu0 %v645
        %v647 = vand.u32 %v246, 4294901760
        %648 = vmatpush.msra.mxu0 %v647
        %v649 = vand.u32 %v245, 4294901760
        %650 = vmatpush.msra.mxu0 %v649
        %v651 = vand.u32 %v244, 4294901760
        %652 = vmatpush.msra.mxu0 %v651
        %v653 = vand.u32 %v243, 4294901760
        %654 = vmatpush.msra.mxu0 %v653
        %v655 = vand.u32 %v242, 4294901760
        %656 = vmatpush.msra.mxu0 %v655
        %v657 = vand.u32 %v241, 4294901760
        %658 = vmatpush.msra.mxu0 %v657
        %v659 = vand.u32 %v240, 4294901760
        %660 = vmatpush.msra.mxu0 %v659
        %v661 = vand.u32 %v239, 4294901760
        %662 = vmatpush.msra.mxu0 %v661
        %v663 = vand.u32 %v238, 4294901760
        %664 = vmatpush.msra.mxu0 %v663
        %v665 = vand.u32 %v237, 4294901760
        %666 = vmatpush.msra.mxu0 %v665
        %v667 = vand.u32 %v287, 4294901760
        %v668 = vsub.f32 %v287, %v667
        %v669 = vand.u32 %v668, 4294901760
        %v670 = vsub.f32 %v668, %v669
        %v671 = vand.u32 %v670, 4294901760
        %672 = vmatmul.f32.gmra.mxu0 %v671
        %v673 = vpop.f32.mrf.mxu0
        %v674 = vadd.f32 %v633, %v673
        %675 = vdwg.mxu0
        %v676 = vand.u32 %v252, 4294901760
        %v677 = vsub.f32 %v252, %v676
        %v678 = vand.u32 %v677, 4294901760
        %v679 = vsub.f32 %v677, %v678
        %v680 = vand.u32 %v679, 4294901760
        %681 = vmatpush.msra.mxu0 %v680
        %v682 = vand.u32 %v251, 4294901760
        %v683 = vsub.f32 %v251, %v682
        %v684 = vand.u32 %v683, 4294901760
        %v685 = vsub.f32 %v683, %v684
        %v686 = vand.u32 %v685, 4294901760
        %687 = vmatpush.msra.mxu0 %v686
        %v688 = vand.u32 %v250, 4294901760
        %v689 = vsub.f32 %v250, %v688
        %v690 = vand.u32 %v689, 4294901760
        %v691 = vsub.f32 %v689, %v690
        %v692 = vand.u32 %v691, 4294901760
        %693 = vmatpush.msra.mxu0 %v692
        %v694 = vand.u32 %v249, 4294901760
        %v695 = vsub.f32 %v249, %v694
        %v696 = vand.u32 %v695, 4294901760
        %v697 = vsub.f32 %v695, %v696
        %v698 = vand.u32 %v697, 4294901760
        %699 = vmatpush.msra.mxu0 %v698
        %v700 = vand.u32 %v248, 4294901760
        %v701 = vsub.f32 %v248, %v700
        %v702 = vand.u32 %v701, 4294901760
        %v703 = vsub.f32 %v701, %v702
        %v704 = vand.u32 %v703, 4294901760
        %705 = vmatpush.msra.mxu0 %v704
        %v706 = vand.u32 %v247, 4294901760
        %v707 = vsub.f32 %v247, %v706
        %v708 = vand.u32 %v707, 4294901760
        %v709 = vsub.f32 %v707, %v708
        %v710 = vand.u32 %v709, 4294901760
        %711 = vmatpush.msra.mxu0 %v710
        %v712 = vand.u32 %v246, 4294901760
        %v713 = vsub.f32 %v246, %v712
        %v714 = vand.u32 %v713, 4294901760
        %v715 = vsub.f32 %v713, %v714
        %v716 = vand.u32 %v715, 4294901760
        %717 = vmatpush.msra.mxu0 %v716
        %v718 = vand.u32 %v245, 4294901760
        %v719 = vsub.f32 %v245, %v718
        %v720 = vand.u32 %v719, 4294901760
        %v721 = vsub.f32 %v719, %v720
        %v722 = vand.u32 %v721, 4294901760
        %723 = vmatpush.msra.mxu0 %v722
        %v724 = vand.u32 %v244, 4294901760
        %v725 = vsub.f32 %v244, %v724
        %v726 = vand.u32 %v725, 4294901760
        %v727 = vsub.f32 %v725, %v726
        %v728 = vand.u32 %v727, 4294901760
        %729 = vmatpush.msra.mxu0 %v728
        %v730 = vand.u32 %v243, 4294901760
        %v731 = vsub.f32 %v243, %v730
        %v732 = vand.u32 %v731, 4294901760
        %v733 = vsub.f32 %v731, %v732
        %v734 = vand.u32 %v733, 4294901760
        %735 = vmatpush.msra.mxu0 %v734
        %v736 = vand.u32 %v242, 4294901760
        %v737 = vsub.f32 %v242, %v736
        %v738 = vand.u32 %v737, 4294901760
        %v739 = vsub.f32 %v737, %v738
        %v740 = vand.u32 %v739, 4294901760
        %741 = vmatpush.msra.mxu0 %v740
        %v742 = vand.u32 %v241, 4294901760
        %v743 = vsub.f32 %v241, %v742
        %v744 = vand.u32 %v743, 4294901760
        %v745 = vsub.f32 %v743, %v744
        %v746 = vand.u32 %v745, 4294901760
        %747 = vmatpush.msra.mxu0 %v746
        %v748 = vand.u32 %v240, 4294901760
        %v749 = vsub.f32 %v240, %v748
        %v750 = vand.u32 %v749, 4294901760
        %v751 = vsub.f32 %v749, %v750
        %v752 = vand.u32 %v751, 4294901760
        %753 = vmatpush.msra.mxu0 %v752
        %v754 = vand.u32 %v239, 4294901760
        %v755 = vsub.f32 %v239, %v754
        %v756 = vand.u32 %v755, 4294901760
        %v757 = vsub.f32 %v755, %v756
        %v758 = vand.u32 %v757, 4294901760
        %759 = vmatpush.msra.mxu0 %v758
        %v760 = vand.u32 %v238, 4294901760
        %v761 = vsub.f32 %v238, %v760
        %v762 = vand.u32 %v761, 4294901760
        %v763 = vsub.f32 %v761, %v762
        %v764 = vand.u32 %v763, 4294901760
        %765 = vmatpush.msra.mxu0 %v764
        %v766 = vand.u32 %v237, 4294901760
        %v767 = vsub.f32 %v237, %v766
        %v768 = vand.u32 %v767, 4294901760
        %v769 = vsub.f32 %v767, %v768
        %v770 = vand.u32 %v769, 4294901760
        %771 = vmatpush.msra.mxu0 %v770
        %v772 = vand.u32 %v287, 4294901760
        %773 = vmatmul.f32.gmra.mxu0 %v772
        %v774 = vpop.f32.mrf.mxu0
        %v775 = vadd.f32 %v674, %v774
        %776 = vdwg.mxu0
        %v777 = vand.u32 %v252, 4294901760
        %v778 = vsub.f32 %v252, %v777
        %779 = vmatpush.msra.mxu0 %v778
        %v780 = vand.u32 %v251, 4294901760
        %v781 = vsub.f32 %v251, %v780
        %782 = vmatpush.msra.mxu0 %v781
        %v783 = vand.u32 %v250, 4294901760
        %v784 = vsub.f32 %v250, %v783
        %785 = vmatpush.msra.mxu0 %v784
        %v786 = vand.u32 %v249, 4294901760
        %v787 = vsub.f32 %v249, %v786
        %788 = vmatpush.msra.mxu0 %v787
        %v789 = vand.u32 %v248, 4294901760
        %v790 = vsub.f32 %v248, %v789
        %791 = vmatpush.msra.mxu0 %v790
        %v792 = vand.u32 %v247, 4294901760
        %v793 = vsub.f32 %v247, %v792
        %794 = vmatpush.msra.mxu0 %v793
        %v795 = vand.u32 %v246, 4294901760
        %v796 = vsub.f32 %v246, %v795
        %797 = vmatpush.msra.mxu0 %v796
        %v798 = vand.u32 %v245, 4294901760
        %v799 = vsub.f32 %v245, %v798
        %800 = vmatpush.msra.mxu0 %v799
        %v801 = vand.u32 %v244, 4294901760
        %v802 = vsub.f32 %v244, %v801
        %803 = vmatpush.msra.mxu0 %v802
        %v804 = vand.u32 %v243, 4294901760
        %v805 = vsub.f32 %v243, %v804
        %806 = vmatpush.msra.mxu0 %v805
        %v807 = vand.u32 %v242, 4294901760
        %v808 = vsub.f32 %v242, %v807
        %809 = vmatpush.msra.mxu0 %v808
        %v810 = vand.u32 %v241, 4294901760
        %v811 = vsub.f32 %v241, %v810
        %812 = vmatpush.msra.mxu0 %v811
        %v813 = vand.u32 %v240, 4294901760
        %v814 = vsub.f32 %v240, %v813
        %815 = vmatpush.msra.mxu0 %v814
        %v816 = vand.u32 %v239, 4294901760
        %v817 = vsub.f32 %v239, %v816
        %818 = vmatpush.msra.mxu0 %v817
        %v819 = vand.u32 %v238, 4294901760
        %v820 = vsub.f32 %v238, %v819
        %821 = vmatpush.msra.mxu0 %v820
        %v822 = vand.u32 %v237, 4294901760
        %v823 = vsub.f32 %v237, %v822
        %824 = vmatpush.msra.mxu0 %v823
        %v825 = vand.u32 %v287, 4294901760
        %v826 = vsub.f32 %v287, %v825
        %827 = vmatmul.f32.gmra.mxu0 %v826
        %v828 = vpop.f32.mrf.mxu0
        %v829 = vadd.f32 %v775, %v828
        %830 = vdwg.mxu0
        %v831 = vand.u32 %v252, 4294901760
        %832 = vmatpush.msra.mxu0 %v831
        %v833 = vand.u32 %v251, 4294901760
        %834 = vmatpush.msra.mxu0 %v833
        %v835 = vand.u32 %v250, 4294901760
        %836 = vmatpush.msra.mxu0 %v835
        %v837 = vand.u32 %v249, 4294901760
        %838 = vmatpush.msra.mxu0 %v837
        %v839 = vand.u32 %v248, 4294901760
        %840 = vmatpush.msra.mxu0 %v839
        %v841 = vand.u32 %v247, 4294901760
        %842 = vmatpush.msra.mxu0 %v841
        %v843 = vand.u32 %v246, 4294901760
        %844 = vmatpush.msra.mxu0 %v843
        %v845 = vand.u32 %v245, 4294901760
        %846 = vmatpush.msra.mxu0 %v845
        %v847 = vand.u32 %v244, 4294901760
        %848 = vmatpush.msra.mxu0 %v847
        %v849 = vand.u32 %v243, 4294901760
        %850 = vmatpush.msra.mxu0 %v849
        %v851 = vand.u32 %v242, 4294901760
        %852 = vmatpush.msra.mxu0 %v851
        %v853 = vand.u32 %v241, 4294901760
        %854 = vmatpush.msra.mxu0 %v853
        %v855 = vand.u32 %v240, 4294901760
        %856 = vmatpush.msra.mxu0 %v855
        %v857 = vand.u32 %v239, 4294901760
        %858 = vmatpush.msra.mxu0 %v857
        %v859 = vand.u32 %v238, 4294901760
        %860 = vmatpush.msra.mxu0 %v859
        %v861 = vand.u32 %v237, 4294901760
        %862 = vmatpush.msra.mxu0 %v861
        %v863 = vand.u32 %v287, 4294901760
        %v864 = vsub.f32 %v287, %v863
        %v865 = vand.u32 %v864, 4294901760
        %866 = vmatmul.f32.gmra.mxu0 %v865
        %v867 = vpop.f32.mrf.mxu0
        %v868 = vadd.f32 %v829, %v867
        %869 = vdwg.mxu0
        %v870 = vand.u32 %v252, 4294901760
        %v871 = vsub.f32 %v252, %v870
        %v872 = vand.u32 %v871, 4294901760
        %873 = vmatpush.msra.mxu0 %v872
        %v874 = vand.u32 %v251, 4294901760
        %v875 = vsub.f32 %v251, %v874
        %v876 = vand.u32 %v875, 4294901760
        %877 = vmatpush.msra.mxu0 %v876
        %v878 = vand.u32 %v250, 4294901760
        %v879 = vsub.f32 %v250, %v878
        %v880 = vand.u32 %v879, 4294901760
        %881 = vmatpush.msra.mxu0 %v880
        %v882 = vand.u32 %v249, 4294901760
        %v883 = vsub.f32 %v249, %v882
        %v884 = vand.u32 %v883, 4294901760
        %885 = vmatpush.msra.mxu0 %v884
        %v886 = vand.u32 %v248, 4294901760
        %v887 = vsub.f32 %v248, %v886
        %v888 = vand.u32 %v887, 4294901760
        %889 = vmatpush.msra.mxu0 %v888
        %v890 = vand.u32 %v247, 4294901760
        %v891 = vsub.f32 %v247, %v890
        %v892 = vand.u32 %v891, 4294901760
        %893 = vmatpush.msra.mxu0 %v892
        %v894 = vand.u32 %v246, 4294901760
        %v895 = vsub.f32 %v246, %v894
        %v896 = vand.u32 %v895, 4294901760
        %897 = vmatpush.msra.mxu0 %v896
        %v898 = vand.u32 %v245, 4294901760
        %v899 = vsub.f32 %v245, %v898
        %v900 = vand.u32 %v899, 4294901760
        %901 = vmatpush.msra.mxu0 %v900
        %v902 = vand.u32 %v244, 4294901760
        %v903 = vsub.f32 %v244, %v902
        %v904 = vand.u32 %v903, 4294901760
        %905 = vmatpush.msra.mxu0 %v904
        %v906 = vand.u32 %v243, 4294901760
        %v907 = vsub.f32 %v243, %v906
        %v908 = vand.u32 %v907, 4294901760
        %909 = vmatpush.msra.mxu0 %v908
        %v910 = vand.u32 %v242, 4294901760
        %v911 = vsub.f32 %v242, %v910
        %v912 = vand.u32 %v911, 4294901760
        %913 = vmatpush.msra.mxu0 %v912
        %v914 = vand.u32 %v241, 4294901760
        %v915 = vsub.f32 %v241, %v914
        %v916 = vand.u32 %v915, 4294901760
        %917 = vmatpush.msra.mxu0 %v916
        %v918 = vand.u32 %v240, 4294901760
        %v919 = vsub.f32 %v240, %v918
        %v920 = vand.u32 %v919, 4294901760
        %921 = vmatpush.msra.mxu0 %v920
        %v922 = vand.u32 %v239, 4294901760
        %v923 = vsub.f32 %v239, %v922
        %v924 = vand.u32 %v923, 4294901760
        %925 = vmatpush.msra.mxu0 %v924
        %v926 = vand.u32 %v238, 4294901760
        %v927 = vsub.f32 %v238, %v926
        %v928 = vand.u32 %v927, 4294901760
        %929 = vmatpush.msra.mxu0 %v928
        %v930 = vand.u32 %v237, 4294901760
        %v931 = vsub.f32 %v237, %v930
        %v932 = vand.u32 %v931, 4294901760
        %933 = vmatpush.msra.mxu0 %v932
        %v934 = vand.u32 %v287, 4294901760
        %935 = vmatmul.f32.gmra.mxu0 %v934
        %v936 = vpop.f32.mrf.mxu0
        %v937 = vadd.f32 %v868, %v936
        %938 = vdwg.mxu0
        %v939 = vand.u32 %v252, 4294901760
        %940 = vmatpush.msra.mxu0 %v939
        %v941 = vand.u32 %v251, 4294901760
        %942 = vmatpush.msra.mxu0 %v941
        %v943 = vand.u32 %v250, 4294901760
        %944 = vmatpush.msra.mxu0 %v943
        %v945 = vand.u32 %v249, 4294901760
        %946 = vmatpush.msra.mxu0 %v945
        %v947 = vand.u32 %v248, 4294901760
        %948 = vmatpush.msra.mxu0 %v947
        %v949 = vand.u32 %v247, 4294901760
        %950 = vmatpush.msra.mxu0 %v949
        %v951 = vand.u32 %v246, 4294901760
        %952 = vmatpush.msra.mxu0 %v951
        %v953 = vand.u32 %v245, 4294901760
        %954 = vmatpush.msra.mxu0 %v953
        %v955 = vand.u32 %v244, 4294901760
        %956 = vmatpush.msra.mxu0 %v955
        %v957 = vand.u32 %v243, 4294901760
        %958 = vmatpush.msra.mxu0 %v957
        %v959 = vand.u32 %v242, 4294901760
        %960 = vmatpush.msra.mxu0 %v959
        %v961 = vand.u32 %v241, 4294901760
        %962 = vmatpush.msra.mxu0 %v961
        %v963 = vand.u32 %v240, 4294901760
        %964 = vmatpush.msra.mxu0 %v963
        %v965 = vand.u32 %v239, 4294901760
        %966 = vmatpush.msra.mxu0 %v965
        %v967 = vand.u32 %v238, 4294901760
        %968 = vmatpush.msra.mxu0 %v967
        %v969 = vand.u32 %v237, 4294901760
        %970 = vmatpush.msra.mxu0 %v969
        %v971 = vand.u32 %v287, 4294901760
        %972 = vmatmul.f32.gmra.mxu0 %v971
        %v973 = vpop.f32.mrf.mxu0
        %v974 = vadd.f32 %v937, %v973
        %975 = vdwg.mxu0
        %v976 = vand.u32 %v268, 4294901760
        %977 = vmatpush.msra.mxu0 %v976
        %v978 = vand.u32 %v267, 4294901760
        %979 = vmatpush.msra.mxu0 %v978
        %v980 = vand.u32 %v266, 4294901760
        %981 = vmatpush.msra.mxu0 %v980
        %v982 = vand.u32 %v265, 4294901760
        %983 = vmatpush.msra.mxu0 %v982
        %v984 = vand.u32 %v264, 4294901760
        %985 = vmatpush.msra.mxu0 %v984
        %v986 = vand.u32 %v263, 4294901760
        %987 = vmatpush.msra.mxu0 %v986
        %v988 = vand.u32 %v262, 4294901760
        %989 = vmatpush.msra.mxu0 %v988
        %v990 = vand.u32 %v261, 4294901760
        %991 = vmatpush.msra.mxu0 %v990
        %v992 = vand.u32 %v260, 4294901760
        %993 = vmatpush.msra.mxu0 %v992
        %v994 = vand.u32 %v259, 4294901760
        %995 = vmatpush.msra.mxu0 %v994
        %v996 = vand.u32 %v258, 4294901760
        %997 = vmatpush.msra.mxu0 %v996
        %v998 = vand.u32 %v257, 4294901760
        %999 = vmatpush.msra.mxu0 %v998
        %v1000 = vand.u32 %v256, 4294901760
        %1001 = vmatpush.msra.mxu0 %v1000
        %v1002 = vand.u32 %v255, 4294901760
        %1003 = vmatpush.msra.mxu0 %v1002
        %v1004 = vand.u32 %v254, 4294901760
        %1005 = vmatpush.msra.mxu0 %v1004
        %v1006 = vand.u32 %v253, 4294901760
        %1007 = vmatpush.msra.mxu0 %v1006
        %v1008 = vand.u32 %v288, 4294901760
        %v1009 = vsub.f32 %v288, %v1008
        %v1010 = vand.u32 %v1009, 4294901760
        %v1011 = vsub.f32 %v1009, %v1010
        %v1012 = vand.u32 %v1011, 4294901760
        %1013 = vmatmul.f32.gmra.mxu0 %v1012
        %v1014 = vpop.f32.mrf.mxu0
        %v1015 = vadd.f32 %v974, %v1014
        %1016 = vdwg.mxu0
        %v1017 = vand.u32 %v268, 4294901760
        %v1018 = vsub.f32 %v268, %v1017
        %v1019 = vand.u32 %v1018, 4294901760
        %v1020 = vsub.f32 %v1018, %v1019
        %v1021 = vand.u32 %v1020, 4294901760
        %1022 = vmatpush.msra.mxu0 %v1021
        %v1023 = vand.u32 %v267, 4294901760
        %v1024 = vsub.f32 %v267, %v1023
        %v1025 = vand.u32 %v1024, 4294901760
        %v1026 = vsub.f32 %v1024, %v1025
        %v1027 = vand.u32 %v1026, 4294901760
        %1028 = vmatpush.msra.mxu0 %v1027
        %v1029 = vand.u32 %v266, 4294901760
        %v1030 = vsub.f32 %v266, %v1029
        %v1031 = vand.u32 %v1030, 4294901760
        %v1032 = vsub.f32 %v1030, %v1031
        %v1033 = vand.u32 %v1032, 4294901760
        %1034 = vmatpush.msra.mxu0 %v1033
        %v1035 = vand.u32 %v265, 4294901760
        %v1036 = vsub.f32 %v265, %v1035
        %v1037 = vand.u32 %v1036, 4294901760
        %v1038 = vsub.f32 %v1036, %v1037
        %v1039 = vand.u32 %v1038, 4294901760
        %1040 = vmatpush.msra.mxu0 %v1039
        %v1041 = vand.u32 %v264, 4294901760
        %v1042 = vsub.f32 %v264, %v1041
        %v1043 = vand.u32 %v1042, 4294901760
        %v1044 = vsub.f32 %v1042, %v1043
        %v1045 = vand.u32 %v1044, 4294901760
        %1046 = vmatpush.msra.mxu0 %v1045
        %v1047 = vand.u32 %v263, 4294901760
        %v1048 = vsub.f32 %v263, %v1047
        %v1049 = vand.u32 %v1048, 4294901760
        %v1050 = vsub.f32 %v1048, %v1049
        %v1051 = vand.u32 %v1050, 4294901760
        %1052 = vmatpush.msra.mxu0 %v1051
        %v1053 = vand.u32 %v262, 4294901760
        %v1054 = vsub.f32 %v262, %v1053
        %v1055 = vand.u32 %v1054, 4294901760
        %v1056 = vsub.f32 %v1054, %v1055
        %v1057 = vand.u32 %v1056, 4294901760
        %1058 = vmatpush.msra.mxu0 %v1057
        %v1059 = vand.u32 %v261, 4294901760
        %v1060 = vsub.f32 %v261, %v1059
        %v1061 = vand.u32 %v1060, 4294901760
        %v1062 = vsub.f32 %v1060, %v1061
        %v1063 = vand.u32 %v1062, 4294901760
        %1064 = vmatpush.msra.mxu0 %v1063
        %v1065 = vand.u32 %v260, 4294901760
        %v1066 = vsub.f32 %v260, %v1065
        %v1067 = vand.u32 %v1066, 4294901760
        %v1068 = vsub.f32 %v1066, %v1067
        %v1069 = vand.u32 %v1068, 4294901760
        %1070 = vmatpush.msra.mxu0 %v1069
        %v1071 = vand.u32 %v259, 4294901760
        %v1072 = vsub.f32 %v259, %v1071
        %v1073 = vand.u32 %v1072, 4294901760
        %v1074 = vsub.f32 %v1072, %v1073
        %v1075 = vand.u32 %v1074, 4294901760
        %1076 = vmatpush.msra.mxu0 %v1075
        %v1077 = vand.u32 %v258, 4294901760
        %v1078 = vsub.f32 %v258, %v1077
        %v1079 = vand.u32 %v1078, 4294901760
        %v1080 = vsub.f32 %v1078, %v1079
        %v1081 = vand.u32 %v1080, 4294901760
        %1082 = vmatpush.msra.mxu0 %v1081
        %v1083 = vand.u32 %v257, 4294901760
        %v1084 = vsub.f32 %v257, %v1083
        %v1085 = vand.u32 %v1084, 4294901760
        %v1086 = vsub.f32 %v1084, %v1085
        %v1087 = vand.u32 %v1086, 4294901760
        %1088 = vmatpush.msra.mxu0 %v1087
        %v1089 = vand.u32 %v256, 4294901760
        %v1090 = vsub.f32 %v256, %v1089
        %v1091 = vand.u32 %v1090, 4294901760
        %v1092 = vsub.f32 %v1090, %v1091
        %v1093 = vand.u32 %v1092, 4294901760
        %1094 = vmatpush.msra.mxu0 %v1093
        %v1095 = vand.u32 %v255, 4294901760
        %v1096 = vsub.f32 %v255, %v1095
        %v1097 = vand.u32 %v1096, 4294901760
        %v1098 = vsub.f32 %v1096, %v1097
        %v1099 = vand.u32 %v1098, 4294901760
        %1100 = vmatpush.msra.mxu0 %v1099
        %v1101 = vand.u32 %v254, 4294901760
        %v1102 = vsub.f32 %v254, %v1101
        %v1103 = vand.u32 %v1102, 4294901760
        %v1104 = vsub.f32 %v1102, %v1103
        %v1105 = vand.u32 %v1104, 4294901760
        %1106 = vmatpush.msra.mxu0 %v1105
        %v1107 = vand.u32 %v253, 4294901760
        %v1108 = vsub.f32 %v253, %v1107
        %v1109 = vand.u32 %v1108, 4294901760
        %v1110 = vsub.f32 %v1108, %v1109
        %v1111 = vand.u32 %v1110, 4294901760
        %1112 = vmatpush.msra.mxu0 %v1111
        %v1113 = vand.u32 %v288, 4294901760
        %1114 = vmatmul.f32.gmra.mxu0 %v1113
        %v1115 = vpop.f32.mrf.mxu0
        %v1116 = vadd.f32 %v1015, %v1115
        %1117 = vdwg.mxu0
        %v1118 = vand.u32 %v268, 4294901760
        %v1119 = vsub.f32 %v268, %v1118
        %1120 = vmatpush.msra.mxu0 %v1119
        %v1121 = vand.u32 %v267, 4294901760
        %v1122 = vsub.f32 %v267, %v1121
        %1123 = vmatpush.msra.mxu0 %v1122
        %v1124 = vand.u32 %v266, 4294901760
        %v1125 = vsub.f32 %v266, %v1124
        %1126 = vmatpush.msra.mxu0 %v1125
        %v1127 = vand.u32 %v265, 4294901760
        %v1128 = vsub.f32 %v265, %v1127
        %1129 = vmatpush.msra.mxu0 %v1128
        %v1130 = vand.u32 %v264, 4294901760
        %v1131 = vsub.f32 %v264, %v1130
        %1132 = vmatpush.msra.mxu0 %v1131
        %v1133 = vand.u32 %v263, 4294901760
        %v1134 = vsub.f32 %v263, %v1133
        %1135 = vmatpush.msra.mxu0 %v1134
        %v1136 = vand.u32 %v262, 4294901760
        %v1137 = vsub.f32 %v262, %v1136
        %1138 = vmatpush.msra.mxu0 %v1137
        %v1139 = vand.u32 %v261, 4294901760
        %v1140 = vsub.f32 %v261, %v1139
        %1141 = vmatpush.msra.mxu0 %v1140
        %v1142 = vand.u32 %v260, 4294901760
        %v1143 = vsub.f32 %v260, %v1142
        %1144 = vmatpush.msra.mxu0 %v1143
        %v1145 = vand.u32 %v259, 4294901760
        %v1146 = vsub.f32 %v259, %v1145
        %1147 = vmatpush.msra.mxu0 %v1146
        %v1148 = vand.u32 %v258, 4294901760
        %v1149 = vsub.f32 %v258, %v1148
        %1150 = vmatpush.msra.mxu0 %v1149
        %v1151 = vand.u32 %v257, 4294901760
        %v1152 = vsub.f32 %v257, %v1151
        %1153 = vmatpush.msra.mxu0 %v1152
        %v1154 = vand.u32 %v256, 4294901760
        %v1155 = vsub.f32 %v256, %v1154
        %1156 = vmatpush.msra.mxu0 %v1155
        %v1157 = vand.u32 %v255, 4294901760
        %v1158 = vsub.f32 %v255, %v1157
        %1159 = vmatpush.msra.mxu0 %v1158
        %v1160 = vand.u32 %v254, 4294901760
        %v1161 = vsub.f32 %v254, %v1160
        %1162 = vmatpush.msra.mxu0 %v1161
        %v1163 = vand.u32 %v253, 4294901760
        %v1164 = vsub.f32 %v253, %v1163
        %1165 = vmatpush.msra.mxu0 %v1164
        %v1166 = vand.u32 %v288, 4294901760
        %v1167 = vsub.f32 %v288, %v1166
        %1168 = vmatmul.f32.gmra.mxu0 %v1167
        %v1169 = vpop.f32.mrf.mxu0
        %v1170 = vadd.f32 %v1116, %v1169
        %1171 = vdwg.mxu0
        %v1172 = vand.u32 %v268, 4294901760
        %1173 = vmatpush.msra.mxu0 %v1172
        %v1174 = vand.u32 %v267, 4294901760
        %1175 = vmatpush.msra.mxu0 %v1174
        %v1176 = vand.u32 %v266, 4294901760
        %1177 = vmatpush.msra.mxu0 %v1176
        %v1178 = vand.u32 %v265, 4294901760
        %1179 = vmatpush.msra.mxu0 %v1178
        %v1180 = vand.u32 %v264, 4294901760
        %1181 = vmatpush.msra.mxu0 %v1180
        %v1182 = vand.u32 %v263, 4294901760
        %1183 = vmatpush.msra.mxu0 %v1182
        %v1184 = vand.u32 %v262, 4294901760
        %1185 = vmatpush.msra.mxu0 %v1184
        %v1186 = vand.u32 %v261, 4294901760
        %1187 = vmatpush.msra.mxu0 %v1186
        %v1188 = vand.u32 %v260, 4294901760
        %1189 = vmatpush.msra.mxu0 %v1188
        %v1190 = vand.u32 %v259, 4294901760
        %1191 = vmatpush.msra.mxu0 %v1190
        %v1192 = vand.u32 %v258, 4294901760
        %1193 = vmatpush.msra.mxu0 %v1192
        %v1194 = vand.u32 %v257, 4294901760
        %1195 = vmatpush.msra.mxu0 %v1194
        %v1196 = vand.u32 %v256, 4294901760
        %1197 = vmatpush.msra.mxu0 %v1196
        %v1198 = vand.u32 %v255, 4294901760
        %1199 = vmatpush.msra.mxu0 %v1198
        %v1200 = vand.u32 %v254, 4294901760
        %1201 = vmatpush.msra.mxu0 %v1200
        %v1202 = vand.u32 %v253, 4294901760
        %1203 = vmatpush.msra.mxu0 %v1202
        %v1204 = vand.u32 %v288, 4294901760
        %v1205 = vsub.f32 %v288, %v1204
        %v1206 = vand.u32 %v1205, 4294901760
        %1207 = vmatmul.f32.gmra.mxu0 %v1206
        %v1208 = vpop.f32.mrf.mxu0
        %v1209 = vadd.f32 %v1170, %v1208
        %1210 = vdwg.mxu0
        %v1211 = vand.u32 %v268, 4294901760
        %v1212 = vsub.f32 %v268, %v1211
        %v1213 = vand.u32 %v1212, 4294901760
        %1214 = vmatpush.msra.mxu0 %v1213
        %v1215 = vand.u32 %v267, 4294901760
        %v1216 = vsub.f32 %v267, %v1215
        %v1217 = vand.u32 %v1216, 4294901760
        %1218 = vmatpush.msra.mxu0 %v1217
        %v1219 = vand.u32 %v266, 4294901760
        %v1220 = vsub.f32 %v266, %v1219
        %v1221 = vand.u32 %v1220, 4294901760
        %1222 = vmatpush.msra.mxu0 %v1221
        %v1223 = vand.u32 %v265, 4294901760
        %v1224 = vsub.f32 %v265, %v1223
        %v1225 = vand.u32 %v1224, 4294901760
        %1226 = vmatpush.msra.mxu0 %v1225
        %v1227 = vand.u32 %v264, 4294901760
        %v1228 = vsub.f32 %v264, %v1227
        %v1229 = vand.u32 %v1228, 4294901760
        %1230 = vmatpush.msra.mxu0 %v1229
        %v1231 = vand.u32 %v263, 4294901760
        %v1232 = vsub.f32 %v263, %v1231
        %v1233 = vand.u32 %v1232, 4294901760
        %1234 = vmatpush.msra.mxu0 %v1233
        %v1235 = vand.u32 %v262, 4294901760
        %v1236 = vsub.f32 %v262, %v1235
        %v1237 = vand.u32 %v1236, 4294901760
        %1238 = vmatpush.msra.mxu0 %v1237
        %v1239 = vand.u32 %v261, 4294901760
        %v1240 = vsub.f32 %v261, %v1239
        %v1241 = vand.u32 %v1240, 4294901760
        %1242 = vmatpush.msra.mxu0 %v1241
        %v1243 = vand.u32 %v260, 4294901760
        %v1244 = vsub.f32 %v260, %v1243
        %v1245 = vand.u32 %v1244, 4294901760
        %1246 = vmatpush.msra.mxu0 %v1245
        %v1247 = vand.u32 %v259, 4294901760
        %v1248 = vsub.f32 %v259, %v1247
        %v1249 = vand.u32 %v1248, 4294901760
        %1250 = vmatpush.msra.mxu0 %v1249
        %v1251 = vand.u32 %v258, 4294901760
        %v1252 = vsub.f32 %v258, %v1251
        %v1253 = vand.u32 %v1252, 4294901760
        %1254 = vmatpush.msra.mxu0 %v1253
        %v1255 = vand.u32 %v257, 4294901760
        %v1256 = vsub.f32 %v257, %v1255
        %v1257 = vand.u32 %v1256, 4294901760
        %1258 = vmatpush.msra.mxu0 %v1257
        %v1259 = vand.u32 %v256, 4294901760
        %v1260 = vsub.f32 %v256, %v1259
        %v1261 = vand.u32 %v1260, 4294901760
        %1262 = vmatpush.msra.mxu0 %v1261
        %v1263 = vand.u32 %v255, 4294901760
        %v1264 = vsub.f32 %v255, %v1263
        %v1265 = vand.u32 %v1264, 4294901760
        %1266 = vmatpush.msra.mxu0 %v1265
        %v1267 = vand.u32 %v254, 4294901760
        %v1268 = vsub.f32 %v254, %v1267
        %v1269 = vand.u32 %v1268, 4294901760
        %1270 = vmatpush.msra.mxu0 %v1269
        %v1271 = vand.u32 %v253, 4294901760
        %v1272 = vsub.f32 %v253, %v1271
        %v1273 = vand.u32 %v1272, 4294901760
        %1274 = vmatpush.msra.mxu0 %v1273
        %v1275 = vand.u32 %v288, 4294901760
        %1276 = vmatmul.f32.gmra.mxu0 %v1275
        %v1277 = vpop.f32.mrf.mxu0
        %v1278 = vadd.f32 %v1209, %v1277
        %1279 = vdwg.mxu0
        %v1280 = vand.u32 %v268, 4294901760
        %1281 = vmatpush.msra.mxu0 %v1280
        %v1282 = vand.u32 %v267, 4294901760
        %1283 = vmatpush.msra.mxu0 %v1282
        %v1284 = vand.u32 %v266, 4294901760
        %1285 = vmatpush.msra.mxu0 %v1284
        %v1286 = vand.u32 %v265, 4294901760
        %1287 = vmatpush.msra.mxu0 %v1286
        %v1288 = vand.u32 %v264, 4294901760
        %1289 = vmatpush.msra.mxu0 %v1288
        %v1290 = vand.u32 %v263, 4294901760
        %1291 = vmatpush.msra.mxu0 %v1290
        %v1292 = vand.u32 %v262, 4294901760
        %1293 = vmatpush.msra.mxu0 %v1292
        %v1294 = vand.u32 %v261, 4294901760
        %1295 = vmatpush.msra.mxu0 %v1294
        %v1296 = vand.u32 %v260, 4294901760
        %1297 = vmatpush.msra.mxu0 %v1296
        %v1298 = vand.u32 %v259, 4294901760
        %1299 = vmatpush.msra.mxu0 %v1298
        %v1300 = vand.u32 %v258, 4294901760
        %1301 = vmatpush.msra.mxu0 %v1300
        %v1302 = vand.u32 %v257, 4294901760
        %1303 = vmatpush.msra.mxu0 %v1302
        %v1304 = vand.u32 %v256, 4294901760
        %1305 = vmatpush.msra.mxu0 %v1304
        %v1306 = vand.u32 %v255, 4294901760
        %1307 = vmatpush.msra.mxu0 %v1306
        %v1308 = vand.u32 %v254, 4294901760
        %1309 = vmatpush.msra.mxu0 %v1308
        %v1310 = vand.u32 %v253, 4294901760
        %1311 = vmatpush.msra.mxu0 %v1310
        %v1312 = vand.u32 %v288, 4294901760
        %1313 = vmatmul.f32.gmra.mxu0 %v1312
        %v1314 = vpop.f32.mrf.mxu0
        %v1315 = vadd.f32 %v1278, %v1314
        %1316 = vdwg.mxu0
        %v1317 = vand.u32 %v284, 4294901760
        %1318 = vmatpush.msra.mxu0 %v1317
        %v1319 = vand.u32 %v283, 4294901760
        %1320 = vmatpush.msra.mxu0 %v1319
        %v1321 = vand.u32 %v282, 4294901760
        %1322 = vmatpush.msra.mxu0 %v1321
        %v1323 = vand.u32 %v281, 4294901760
        %1324 = vmatpush.msra.mxu0 %v1323
        %v1325 = vand.u32 %v280, 4294901760
        %1326 = vmatpush.msra.mxu0 %v1325
        %v1327 = vand.u32 %v279, 4294901760
        %1328 = vmatpush.msra.mxu0 %v1327
        %v1329 = vand.u32 %v278, 4294901760
        %1330 = vmatpush.msra.mxu0 %v1329
        %v1331 = vand.u32 %v277, 4294901760
        %1332 = vmatpush.msra.mxu0 %v1331
        %v1333 = vand.u32 %v276, 4294901760
        %1334 = vmatpush.msra.mxu0 %v1333
        %v1335 = vand.u32 %v275, 4294901760
        %1336 = vmatpush.msra.mxu0 %v1335
        %v1337 = vand.u32 %v274, 4294901760
        %1338 = vmatpush.msra.mxu0 %v1337
        %v1339 = vand.u32 %v273, 4294901760
        %1340 = vmatpush.msra.mxu0 %v1339
        %v1341 = vand.u32 %v272, 4294901760
        %1342 = vmatpush.msra.mxu0 %v1341
        %v1343 = vand.u32 %v271, 4294901760
        %1344 = vmatpush.msra.mxu0 %v1343
        %v1345 = vand.u32 %v270, 4294901760
        %1346 = vmatpush.msra.mxu0 %v1345
        %v1347 = vand.u32 %v269, 4294901760
        %1348 = vmatpush.msra.mxu0 %v1347
        %v1349 = vand.u32 %v289, 4294901760
        %v1350 = vsub.f32 %v289, %v1349
        %v1351 = vand.u32 %v1350, 4294901760
        %v1352 = vsub.f32 %v1350, %v1351
        %v1353 = vand.u32 %v1352, 4294901760
        %1354 = vmatmul.f32.gmra.mxu0 %v1353
        %v1355 = vpop.f32.mrf.mxu0
        %v1356 = vadd.f32 %v1315, %v1355
        %1357 = vdwg.mxu0
        %v1358 = vand.u32 %v284, 4294901760
        %v1359 = vsub.f32 %v284, %v1358
        %v1360 = vand.u32 %v1359, 4294901760
        %v1361 = vsub.f32 %v1359, %v1360
        %v1362 = vand.u32 %v1361, 4294901760
        %1363 = vmatpush.msra.mxu0 %v1362
        %v1364 = vand.u32 %v283, 4294901760
        %v1365 = vsub.f32 %v283, %v1364
        %v1366 = vand.u32 %v1365, 4294901760
        %v1367 = vsub.f32 %v1365, %v1366
        %v1368 = vand.u32 %v1367, 4294901760
        %1369 = vmatpush.msra.mxu0 %v1368
        %v1370 = vand.u32 %v282, 4294901760
        %v1371 = vsub.f32 %v282, %v1370
        %v1372 = vand.u32 %v1371, 4294901760
        %v1373 = vsub.f32 %v1371, %v1372
        %v1374 = vand.u32 %v1373, 4294901760
        %1375 = vmatpush.msra.mxu0 %v1374
        %v1376 = vand.u32 %v281, 4294901760
        %v1377 = vsub.f32 %v281, %v1376
        %v1378 = vand.u32 %v1377, 4294901760
        %v1379 = vsub.f32 %v1377, %v1378
        %v1380 = vand.u32 %v1379, 4294901760
        %1381 = vmatpush.msra.mxu0 %v1380
        %v1382 = vand.u32 %v280, 4294901760
        %v1383 = vsub.f32 %v280, %v1382
        %v1384 = vand.u32 %v1383, 4294901760
        %v1385 = vsub.f32 %v1383, %v1384
        %v1386 = vand.u32 %v1385, 4294901760
        %1387 = vmatpush.msra.mxu0 %v1386
        %v1388 = vand.u32 %v279, 4294901760
        %v1389 = vsub.f32 %v279, %v1388
        %v1390 = vand.u32 %v1389, 4294901760
        %v1391 = vsub.f32 %v1389, %v1390
        %v1392 = vand.u32 %v1391, 4294901760
        %1393 = vmatpush.msra.mxu0 %v1392
        %v1394 = vand.u32 %v278, 4294901760
        %v1395 = vsub.f32 %v278, %v1394
        %v1396 = vand.u32 %v1395, 4294901760
        %v1397 = vsub.f32 %v1395, %v1396
        %v1398 = vand.u32 %v1397, 4294901760
        %1399 = vmatpush.msra.mxu0 %v1398
        %v1400 = vand.u32 %v277, 4294901760
        %v1401 = vsub.f32 %v277, %v1400
        %v1402 = vand.u32 %v1401, 4294901760
        %v1403 = vsub.f32 %v1401, %v1402
        %v1404 = vand.u32 %v1403, 4294901760
        %1405 = vmatpush.msra.mxu0 %v1404
        %v1406 = vand.u32 %v276, 4294901760
        %v1407 = vsub.f32 %v276, %v1406
        %v1408 = vand.u32 %v1407, 4294901760
        %v1409 = vsub.f32 %v1407, %v1408
        %v1410 = vand.u32 %v1409, 4294901760
        %1411 = vmatpush.msra.mxu0 %v1410
        %v1412 = vand.u32 %v275, 4294901760
        %v1413 = vsub.f32 %v275, %v1412
        %v1414 = vand.u32 %v1413, 4294901760
        %v1415 = vsub.f32 %v1413, %v1414
        %v1416 = vand.u32 %v1415, 4294901760
        %1417 = vmatpush.msra.mxu0 %v1416
        %v1418 = vand.u32 %v274, 4294901760
        %v1419 = vsub.f32 %v274, %v1418
        %v1420 = vand.u32 %v1419, 4294901760
        %v1421 = vsub.f32 %v1419, %v1420
        %v1422 = vand.u32 %v1421, 4294901760
        %1423 = vmatpush.msra.mxu0 %v1422
        %v1424 = vand.u32 %v273, 4294901760
        %v1425 = vsub.f32 %v273, %v1424
        %v1426 = vand.u32 %v1425, 4294901760
        %v1427 = vsub.f32 %v1425, %v1426
        %v1428 = vand.u32 %v1427, 4294901760
        %1429 = vmatpush.msra.mxu0 %v1428
        %v1430 = vand.u32 %v272, 4294901760
        %v1431 = vsub.f32 %v272, %v1430
        %v1432 = vand.u32 %v1431, 4294901760
        %v1433 = vsub.f32 %v1431, %v1432
        %v1434 = vand.u32 %v1433, 4294901760
        %1435 = vmatpush.msra.mxu0 %v1434
        %v1436 = vand.u32 %v271, 4294901760
        %v1437 = vsub.f32 %v271, %v1436
        %v1438 = vand.u32 %v1437, 4294901760
        %v1439 = vsub.f32 %v1437, %v1438
        %v1440 = vand.u32 %v1439, 4294901760
        %1441 = vmatpush.msra.mxu0 %v1440
        %v1442 = vand.u32 %v270, 4294901760
        %v1443 = vsub.f32 %v270, %v1442
        %v1444 = vand.u32 %v1443, 4294901760
        %v1445 = vsub.f32 %v1443, %v1444
        %v1446 = vand.u32 %v1445, 4294901760
        %1447 = vmatpush.msra.mxu0 %v1446
        %v1448 = vand.u32 %v269, 4294901760
        %v1449 = vsub.f32 %v269, %v1448
        %v1450 = vand.u32 %v1449, 4294901760
        %v1451 = vsub.f32 %v1449, %v1450
        %v1452 = vand.u32 %v1451, 4294901760
        %1453 = vmatpush.msra.mxu0 %v1452
        %v1454 = vand.u32 %v289, 4294901760
        %1455 = vmatmul.f32.gmra.mxu0 %v1454
        %v1456 = vpop.f32.mrf.mxu0
        %v1457 = vadd.f32 %v1356, %v1456
        %1458 = vdwg.mxu0
        %v1459 = vand.u32 %v284, 4294901760
        %v1460 = vsub.f32 %v284, %v1459
        %1461 = vmatpush.msra.mxu0 %v1460
        %v1462 = vand.u32 %v283, 4294901760
        %v1463 = vsub.f32 %v283, %v1462
        %1464 = vmatpush.msra.mxu0 %v1463
        %v1465 = vand.u32 %v282, 4294901760
        %v1466 = vsub.f32 %v282, %v1465
        %1467 = vmatpush.msra.mxu0 %v1466
        %v1468 = vand.u32 %v281, 4294901760
        %v1469 = vsub.f32 %v281, %v1468
        %1470 = vmatpush.msra.mxu0 %v1469
        %v1471 = vand.u32 %v280, 4294901760
        %v1472 = vsub.f32 %v280, %v1471
        %1473 = vmatpush.msra.mxu0 %v1472
        %v1474 = vand.u32 %v279, 4294901760
        %v1475 = vsub.f32 %v279, %v1474
        %1476 = vmatpush.msra.mxu0 %v1475
        %v1477 = vand.u32 %v278, 4294901760
        %v1478 = vsub.f32 %v278, %v1477
        %1479 = vmatpush.msra.mxu0 %v1478
        %v1480 = vand.u32 %v277, 4294901760
        %v1481 = vsub.f32 %v277, %v1480
        %1482 = vmatpush.msra.mxu0 %v1481
        %v1483 = vand.u32 %v276, 4294901760
        %v1484 = vsub.f32 %v276, %v1483
        %1485 = vmatpush.msra.mxu0 %v1484
        %v1486 = vand.u32 %v275, 4294901760
        %v1487 = vsub.f32 %v275, %v1486
        %1488 = vmatpush.msra.mxu0 %v1487
        %v1489 = vand.u32 %v274, 4294901760
        %v1490 = vsub.f32 %v274, %v1489
        %1491 = vmatpush.msra.mxu0 %v1490
        %v1492 = vand.u32 %v273, 4294901760
        %v1493 = vsub.f32 %v273, %v1492
        %1494 = vmatpush.msra.mxu0 %v1493
        %v1495 = vand.u32 %v272, 4294901760
        %v1496 = vsub.f32 %v272, %v1495
        %1497 = vmatpush.msra.mxu0 %v1496
        %v1498 = vand.u32 %v271, 4294901760
        %v1499 = vsub.f32 %v271, %v1498
        %1500 = vmatpush.msra.mxu0 %v1499
        %v1501 = vand.u32 %v270, 4294901760
        %v1502 = vsub.f32 %v270, %v1501
        %1503 = vmatpush.msra.mxu0 %v1502
        %v1504 = vand.u32 %v269, 4294901760
        %v1505 = vsub.f32 %v269, %v1504
        %1506 = vmatpush.msra.mxu0 %v1505
        %v1507 = vand.u32 %v289, 4294901760
        %v1508 = vsub.f32 %v289, %v1507
        %1509 = vmatmul.f32.gmra.mxu0 %v1508
        %v1510 = vpop.f32.mrf.mxu0
        %v1511 = vadd.f32 %v1457, %v1510
        %1512 = vdwg.mxu0
        %v1513 = vand.u32 %v284, 4294901760
        %1514 = vmatpush.msra.mxu0 %v1513
        %v1515 = vand.u32 %v283, 4294901760
        %1516 = vmatpush.msra.mxu0 %v1515
        %v1517 = vand.u32 %v282, 4294901760
        %1518 = vmatpush.msra.mxu0 %v1517
        %v1519 = vand.u32 %v281, 4294901760
        %1520 = vmatpush.msra.mxu0 %v1519
        %v1521 = vand.u32 %v280, 4294901760
        %1522 = vmatpush.msra.mxu0 %v1521
        %v1523 = vand.u32 %v279, 4294901760
        %1524 = vmatpush.msra.mxu0 %v1523
        %v1525 = vand.u32 %v278, 4294901760
        %1526 = vmatpush.msra.mxu0 %v1525
        %v1527 = vand.u32 %v277, 4294901760
        %1528 = vmatpush.msra.mxu0 %v1527
        %v1529 = vand.u32 %v276, 4294901760
        %1530 = vmatpush.msra.mxu0 %v1529
        %v1531 = vand.u32 %v275, 4294901760
        %1532 = vmatpush.msra.mxu0 %v1531
        %v1533 = vand.u32 %v274, 4294901760
        %1534 = vmatpush.msra.mxu0 %v1533
        %v1535 = vand.u32 %v273, 4294901760
        %1536 = vmatpush.msra.mxu0 %v1535
        %v1537 = vand.u32 %v272, 4294901760
        %1538 = vmatpush.msra.mxu0 %v1537
        %v1539 = vand.u32 %v271, 4294901760
        %1540 = vmatpush.msra.mxu0 %v1539
        %v1541 = vand.u32 %v270, 4294901760
        %1542 = vmatpush.msra.mxu0 %v1541
        %v1543 = vand.u32 %v269, 4294901760
        %1544 = vmatpush.msra.mxu0 %v1543
        %v1545 = vand.u32 %v289, 4294901760
        %v1546 = vsub.f32 %v289, %v1545
        %v1547 = vand.u32 %v1546, 4294901760
        %1548 = vmatmul.f32.gmra.mxu0 %v1547
        %v1549 = vpop.f32.mrf.mxu0
        %v1550 = vadd.f32 %v1511, %v1549
        %1551 = vdwg.mxu0
        %v1552 = vand.u32 %v284, 4294901760
        %v1553 = vsub.f32 %v284, %v1552
        %v1554 = vand.u32 %v1553, 4294901760
        %1555 = vmatpush.msra.mxu0 %v1554
        %v1556 = vand.u32 %v283, 4294901760
        %v1557 = vsub.f32 %v283, %v1556
        %v1558 = vand.u32 %v1557, 4294901760
        %1559 = vmatpush.msra.mxu0 %v1558
        %v1560 = vand.u32 %v282, 4294901760
        %v1561 = vsub.f32 %v282, %v1560
        %v1562 = vand.u32 %v1561, 4294901760
        %1563 = vmatpush.msra.mxu0 %v1562
        %v1564 = vand.u32 %v281, 4294901760
        %v1565 = vsub.f32 %v281, %v1564
        %v1566 = vand.u32 %v1565, 4294901760
        %1567 = vmatpush.msra.mxu0 %v1566
        %v1568 = vand.u32 %v280, 4294901760
        %v1569 = vsub.f32 %v280, %v1568
        %v1570 = vand.u32 %v1569, 4294901760
        %1571 = vmatpush.msra.mxu0 %v1570
        %v1572 = vand.u32 %v279, 4294901760
        %v1573 = vsub.f32 %v279, %v1572
        %v1574 = vand.u32 %v1573, 4294901760
        %1575 = vmatpush.msra.mxu0 %v1574
        %v1576 = vand.u32 %v278, 4294901760
        %v1577 = vsub.f32 %v278, %v1576
        %v1578 = vand.u32 %v1577, 4294901760
        %1579 = vmatpush.msra.mxu0 %v1578
        %v1580 = vand.u32 %v277, 4294901760
        %v1581 = vsub.f32 %v277, %v1580
        %v1582 = vand.u32 %v1581, 4294901760
        %1583 = vmatpush.msra.mxu0 %v1582
        %v1584 = vand.u32 %v276, 4294901760
        %v1585 = vsub.f32 %v276, %v1584
        %v1586 = vand.u32 %v1585, 4294901760
        %1587 = vmatpush.msra.mxu0 %v1586
        %v1588 = vand.u32 %v275, 4294901760
        %v1589 = vsub.f32 %v275, %v1588
        %v1590 = vand.u32 %v1589, 4294901760
        %1591 = vmatpush.msra.mxu0 %v1590
        %v1592 = vand.u32 %v274, 4294901760
        %v1593 = vsub.f32 %v274, %v1592
        %v1594 = vand.u32 %v1593, 4294901760
        %1595 = vmatpush.msra.mxu0 %v1594
        %v1596 = vand.u32 %v273, 4294901760
        %v1597 = vsub.f32 %v273, %v1596
        %v1598 = vand.u32 %v1597, 4294901760
        %1599 = vmatpush.msra.mxu0 %v1598
        %v1600 = vand.u32 %v272, 4294901760
        %v1601 = vsub.f32 %v272, %v1600
        %v1602 = vand.u32 %v1601, 4294901760
        %1603 = vmatpush.msra.mxu0 %v1602
        %v1604 = vand.u32 %v271, 4294901760
        %v1605 = vsub.f32 %v271, %v1604
        %v1606 = vand.u32 %v1605, 4294901760
        %1607 = vmatpush.msra.mxu0 %v1606
        %v1608 = vand.u32 %v270, 4294901760
        %v1609 = vsub.f32 %v270, %v1608
        %v1610 = vand.u32 %v1609, 4294901760
        %1611 = vmatpush.msra.mxu0 %v1610
        %v1612 = vand.u32 %v269, 4294901760
        %v1613 = vsub.f32 %v269, %v1612
        %v1614 = vand.u32 %v1613, 4294901760
        %1615 = vmatpush.msra.mxu0 %v1614
        %v1616 = vand.u32 %v289, 4294901760
        %1617 = vmatmul.f32.gmra.mxu0 %v1616
        %v1618 = vpop.f32.mrf.mxu0
        %v1619 = vadd.f32 %v1550, %v1618
        %1620 = vdwg.mxu0
        %v1621 = vand.u32 %v284, 4294901760
        %1622 = vmatpush.msra.mxu0 %v1621
        %v1623 = vand.u32 %v283, 4294901760
        %1624 = vmatpush.msra.mxu0 %v1623
        %v1625 = vand.u32 %v282, 4294901760
        %1626 = vmatpush.msra.mxu0 %v1625
        %v1627 = vand.u32 %v281, 4294901760
        %1628 = vmatpush.msra.mxu0 %v1627
        %v1629 = vand.u32 %v280, 4294901760
        %1630 = vmatpush.msra.mxu0 %v1629
        %v1631 = vand.u32 %v279, 4294901760
        %1632 = vmatpush.msra.mxu0 %v1631
        %v1633 = vand.u32 %v278, 4294901760
        %1634 = vmatpush.msra.mxu0 %v1633
        %v1635 = vand.u32 %v277, 4294901760
        %1636 = vmatpush.msra.mxu0 %v1635
        %v1637 = vand.u32 %v276, 4294901760
        %1638 = vmatpush.msra.mxu0 %v1637
        %v1639 = vand.u32 %v275, 4294901760
        %1640 = vmatpush.msra.mxu0 %v1639
        %v1641 = vand.u32 %v274, 4294901760
        %1642 = vmatpush.msra.mxu0 %v1641
        %v1643 = vand.u32 %v273, 4294901760
        %1644 = vmatpush.msra.mxu0 %v1643
        %v1645 = vand.u32 %v272, 4294901760
        %1646 = vmatpush.msra.mxu0 %v1645
        %v1647 = vand.u32 %v271, 4294901760
        %1648 = vmatpush.msra.mxu0 %v1647
        %v1649 = vand.u32 %v270, 4294901760
        %1650 = vmatpush.msra.mxu0 %v1649
        %v1651 = vand.u32 %v269, 4294901760
        %1652 = vmatpush.msra.mxu0 %v1651
        %v1653 = vand.u32 %v289, 4294901760
        %1654 = vmatmul.f32.gmra.mxu0 %v1653
        %v1655 = vpop.f32.mrf.mxu0
        %v1656 = vadd.f32 %v1619, %v1655
        %1657 = vdwg.mxu0
        %v1658 = vld [vmem:[%s1] sm:$0xff]
        %v1659 = vld [vmem:[%s1 + $0x8] sm:$0xff]
        %v1660 = vld [vmem:[%s1 + $0x10] sm:$0xff]
        %v1661 = vld [vmem:[%s1 + $0x18] sm:$0xff]
        %vm1662 = vcmask 261120
        %v1664 = vsel %vm1662, %v1656, 0
        %1666 = vmatpush.msra.mxu0 0.0
        %1667 = vmatpush.msra.mxu0 0.0
        %1668 = vmatpush.msra.mxu0 0.0
        %1669 = vmatpush.msra.mxu0 0.0
        %1670 = vmatpush.msra.mxu0 0.0
        %1671 = vmatpush.msra.mxu0 0.0
        %1672 = vmatpush.msra.mxu0 0.0
        %1673 = vmatpush.msra.mxu0 0.0
        %1674 = vmatpush.msra.mxu0 0.0
        %1675 = vmatpush.msra.mxu0 0.0
        %1676 = vmatpush.msra.mxu0 0.0
        %1677 = vmatpush.msra.mxu0 0.0
        %v1678 = vand.u32 %v1661, 4294901760
        %1679 = vmatpush.msra.mxu0 %v1678
        %v1680 = vand.u32 %v1660, 4294901760
        %1681 = vmatpush.msra.mxu0 %v1680
        %v1682 = vand.u32 %v1659, 4294901760
        %1683 = vmatpush.msra.mxu0 %v1682
        %v1684 = vand.u32 %v1658, 4294901760
        %1685 = vmatpush.msra.mxu0 %v1684
        %v1686 = vand.u32 %v1664, 4294901760
        %v1687 = vsub.f32 %v1664, %v1686
        %v1688 = vand.u32 %v1687, 4294901760
        %v1689 = vsub.f32 %v1687, %v1688
        %v1690 = vand.u32 %v1689, 4294901760
        %1691 = vmatmul.f32.gmra.mxu0 %v1690
        %v1692 = vpop.f32.mrf.mxu0
        %v1693 = vadd.f32 0.0, %v1692
        %1694 = vdwg.mxu0
        %1695 = vmatpush.msra.mxu0 0.0
        %1696 = vmatpush.msra.mxu0 0.0
        %1697 = vmatpush.msra.mxu0 0.0
        %1698 = vmatpush.msra.mxu0 0.0
        %1699 = vmatpush.msra.mxu0 0.0
        %1700 = vmatpush.msra.mxu0 0.0
        %1701 = vmatpush.msra.mxu0 0.0
        %1702 = vmatpush.msra.mxu0 0.0
        %1703 = vmatpush.msra.mxu0 0.0
        %1704 = vmatpush.msra.mxu0 0.0
        %1705 = vmatpush.msra.mxu0 0.0
        %1706 = vmatpush.msra.mxu0 0.0
        %v1707 = vand.u32 %v1661, 4294901760
        %v1708 = vsub.f32 %v1661, %v1707
        %v1709 = vand.u32 %v1708, 4294901760
        %v1710 = vsub.f32 %v1708, %v1709
        %v1711 = vand.u32 %v1710, 4294901760
        %1712 = vmatpush.msra.mxu0 %v1711
        %v1713 = vand.u32 %v1660, 4294901760
        %v1714 = vsub.f32 %v1660, %v1713
        %v1715 = vand.u32 %v1714, 4294901760
        %v1716 = vsub.f32 %v1714, %v1715
        %v1717 = vand.u32 %v1716, 4294901760
        %1718 = vmatpush.msra.mxu0 %v1717
        %v1719 = vand.u32 %v1659, 4294901760
        %v1720 = vsub.f32 %v1659, %v1719
        %v1721 = vand.u32 %v1720, 4294901760
        %v1722 = vsub.f32 %v1720, %v1721
        %v1723 = vand.u32 %v1722, 4294901760
        %1724 = vmatpush.msra.mxu0 %v1723
        %v1725 = vand.u32 %v1658, 4294901760
        %v1726 = vsub.f32 %v1658, %v1725
        %v1727 = vand.u32 %v1726, 4294901760
        %v1728 = vsub.f32 %v1726, %v1727
        %v1729 = vand.u32 %v1728, 4294901760
        %1730 = vmatpush.msra.mxu0 %v1729
        %v1731 = vand.u32 %v1664, 4294901760
        %1732 = vmatmul.f32.gmra.mxu0 %v1731
        %v1733 = vpop.f32.mrf.mxu0
        %v1734 = vadd.f32 %v1693, %v1733
        %1735 = vdwg.mxu0
        %1736 = vmatpush.msra.mxu0 0.0
        %1737 = vmatpush.msra.mxu0 0.0
        %1738 = vmatpush.msra.mxu0 0.0
        %1739 = vmatpush.msra.mxu0 0.0
        %1740 = vmatpush.msra.mxu0 0.0
        %1741 = vmatpush.msra.mxu0 0.0
        %1742 = vmatpush.msra.mxu0 0.0
        %1743 = vmatpush.msra.mxu0 0.0
        %1744 = vmatpush.msra.mxu0 0.0
        %1745 = vmatpush.msra.mxu0 0.0
        %1746 = vmatpush.msra.mxu0 0.0
        %1747 = vmatpush.msra.mxu0 0.0
        %v1748 = vand.u32 %v1661, 4294901760
        %v1749 = vsub.f32 %v1661, %v1748
        %1750 = vmatpush.msra.mxu0 %v1749
        %v1751 = vand.u32 %v1660, 4294901760
        %v1752 = vsub.f32 %v1660, %v1751
        %1753 = vmatpush.msra.mxu0 %v1752
        %v1754 = vand.u32 %v1659, 4294901760
        %v1755 = vsub.f32 %v1659, %v1754
        %1756 = vmatpush.msra.mxu0 %v1755
        %v1757 = vand.u32 %v1658, 4294901760
        %v1758 = vsub.f32 %v1658, %v1757
        %1759 = vmatpush.msra.mxu0 %v1758
        %v1760 = vand.u32 %v1664, 4294901760
        %v1761 = vsub.f32 %v1664, %v1760
        %1762 = vmatmul.f32.gmra.mxu0 %v1761
        %v1763 = vpop.f32.mrf.mxu0
        %v1764 = vadd.f32 %v1734, %v1763
        %1765 = vdwg.mxu0
        %1766 = vmatpush.msra.mxu0 0.0
        %1767 = vmatpush.msra.mxu0 0.0
        %1768 = vmatpush.msra.mxu0 0.0
        %1769 = vmatpush.msra.mxu0 0.0
        %1770 = vmatpush.msra.mxu0 0.0
        %1771 = vmatpush.msra.mxu0 0.0
        %1772 = vmatpush.msra.mxu0 0.0
        %1773 = vmatpush.msra.mxu0 0.0
        %1774 = vmatpush.msra.mxu0 0.0
        %1775 = vmatpush.msra.mxu0 0.0
        %1776 = vmatpush.msra.mxu0 0.0
        %1777 = vmatpush.msra.mxu0 0.0
        %v1778 = vand.u32 %v1661, 4294901760
        %1779 = vmatpush.msra.mxu0 %v1778
        %v1780 = vand.u32 %v1660, 4294901760
        %1781 = vmatpush.msra.mxu0 %v1780
        %v1782 = vand.u32 %v1659, 4294901760
        %1783 = vmatpush.msra.mxu0 %v1782
        %v1784 = vand.u32 %v1658, 4294901760
        %1785 = vmatpush.msra.mxu0 %v1784
        %v1786 = vand.u32 %v1664, 4294901760
        %v1787 = vsub.f32 %v1664, %v1786
        %v1788 = vand.u32 %v1787, 4294901760
        %1789 = vmatmul.f32.gmra.mxu0 %v1788
        %v1790 = vpop.f32.mrf.mxu0
        %v1791 = vadd.f32 %v1764, %v1790
        %1792 = vdwg.mxu0
        %1793 = vmatpush.msra.mxu0 0.0
        %1794 = vmatpush.msra.mxu0 0.0
        %1795 = vmatpush.msra.mxu0 0.0
        %1796 = vmatpush.msra.mxu0 0.0
        %1797 = vmatpush.msra.mxu0 0.0
        %1798 = vmatpush.msra.mxu0 0.0
        %1799 = vmatpush.msra.mxu0 0.0
        %1800 = vmatpush.msra.mxu0 0.0
        %1801 = vmatpush.msra.mxu0 0.0
        %1802 = vmatpush.msra.mxu0 0.0
        %1803 = vmatpush.msra.mxu0 0.0
        %1804 = vmatpush.msra.mxu0 0.0
        %v1805 = vand.u32 %v1661, 4294901760
        %v1806 = vsub.f32 %v1661, %v1805
        %v1807 = vand.u32 %v1806, 4294901760
        %1808 = vmatpush.msra.mxu0 %v1807
        %v1809 = vand.u32 %v1660, 4294901760
        %v1810 = vsub.f32 %v1660, %v1809
        %v1811 = vand.u32 %v1810, 4294901760
        %1812 = vmatpush.msra.mxu0 %v1811
        %v1813 = vand.u32 %v1659, 4294901760
        %v1814 = vsub.f32 %v1659, %v1813
        %v1815 = vand.u32 %v1814, 4294901760
        %1816 = vmatpush.msra.mxu0 %v1815
        %v1817 = vand.u32 %v1658, 4294901760
        %v1818 = vsub.f32 %v1658, %v1817
        %v1819 = vand.u32 %v1818, 4294901760
        %1820 = vmatpush.msra.mxu0 %v1819
        %v1821 = vand.u32 %v1664, 4294901760
        %1822 = vmatmul.f32.gmra.mxu0 %v1821
        %v1823 = vpop.f32.mrf.mxu0
        %v1824 = vadd.f32 %v1791, %v1823
        %1825 = vdwg.mxu0
        %1826 = vmatpush.msra.mxu0 0.0
        %1827 = vmatpush.msra.mxu0 0.0
        %1828 = vmatpush.msra.mxu0 0.0
        %1829 = vmatpush.msra.mxu0 0.0
        %1830 = vmatpush.msra.mxu0 0.0
        %1831 = vmatpush.msra.mxu0 0.0
        %1832 = vmatpush.msra.mxu0 0.0
        %1833 = vmatpush.msra.mxu0 0.0
        %1834 = vmatpush.msra.mxu0 0.0
        %1835 = vmatpush.msra.mxu0 0.0
        %1836 = vmatpush.msra.mxu0 0.0
        %1837 = vmatpush.msra.mxu0 0.0
        %v1838 = vand.u32 %v1661, 4294901760
        %1839 = vmatpush.msra.mxu0 %v1838
        %v1840 = vand.u32 %v1660, 4294901760
        %1841 = vmatpush.msra.mxu0 %v1840
        %v1842 = vand.u32 %v1659, 4294901760
        %1843 = vmatpush.msra.mxu0 %v1842
        %v1844 = vand.u32 %v1658, 4294901760
        %1845 = vmatpush.msra.mxu0 %v1844
        %v1846 = vand.u32 %v1664, 4294901760
        %1847 = vmatmul.f32.gmra.mxu0 %v1846
        %v1848 = vpop.f32.mrf.mxu0
        %v1849 = vadd.f32 %v1824, %v1848
        %1850 = vdwg.mxu0
        %v1851 = vmax.f32 %v1849, 0.0
        %v1852 = vld [vmem:[%s2] sm:$0x3]
        %vm1853 = vcmask 15360
        %v1855 = vsel %vm1853, %v1851, 0
        %vm1857 = vcmask 1041408
        %v1859 = vsel %vm1857, %v1852, 0
        %1861 = vmatpush.msra.mxu0 0.0
        %1862 = vmatpush.msra.mxu0 0.0
        %1863 = vmatpush.msra.mxu0 0.0
        %1864 = vmatpush.msra.mxu0 0.0
        %1865 = vmatpush.msra.mxu0 0.0
        %1866 = vmatpush.msra.mxu0 0.0
        %1867 = vmatpush.msra.mxu0 0.0
        %1868 = vmatpush.msra.mxu0 0.0
        %1869 = vmatpush.msra.mxu0 0.0
        %1870 = vmatpush.msra.mxu0 0.0
        %1871 = vmatpush.msra.mxu0 0.0
        %1872 = vmatpush.msra.mxu0 0.0
        %1873 = vmatpush.msra.mxu0 0.0
        %1874 = vmatpush.msra.mxu0 0.0
        %1875 = vmatpush.msra.mxu0 0.0
        %v1876 = vand.u32 %v1859, 4294901760
        %1877 = vmatpush.msra.mxu0 %v1876
        %v1878 = vand.u32 %v1855, 4294901760
        %v1879 = vsub.f32 %v1855, %v1878
        %v1880 = vand.u32 %v1879, 4294901760
        %v1881 = vsub.f32 %v1879, %v1880
        %v1882 = vand.u32 %v1881, 4294901760
        %1883 = vmatmul.f32.gmra.mxu0 %v1882
        %v1884 = vpop.f32.mrf.mxu0
        %v1885 = vadd.f32 0.0, %v1884
        %1886 = vdwg.mxu0
        %1887 = vmatpush.msra.mxu0 0.0
        %1888 = vmatpush.msra.mxu0 0.0
        %1889 = vmatpush.msra.mxu0 0.0
        %1890 = vmatpush.msra.mxu0 0.0
        %1891 = vmatpush.msra.mxu0 0.0
        %1892 = vmatpush.msra.mxu0 0.0
        %1893 = vmatpush.msra.mxu0 0.0
        %1894 = vmatpush.msra.mxu0 0.0
        %1895 = vmatpush.msra.mxu0 0.0
        %1896 = vmatpush.msra.mxu0 0.0
        %1897 = vmatpush.msra.mxu0 0.0
        %1898 = vmatpush.msra.mxu0 0.0
        %1899 = vmatpush.msra.mxu0 0.0
        %1900 = vmatpush.msra.mxu0 0.0
        %1901 = vmatpush.msra.mxu0 0.0
        %v1902 = vand.u32 %v1859, 4294901760
        %v1903 = vsub.f32 %v1859, %v1902
        %v1904 = vand.u32 %v1903, 4294901760
        %v1905 = vsub.f32 %v1903, %v1904
        %v1906 = vand.u32 %v1905, 4294901760
        %1907 = vmatpush.msra.mxu0 %v1906
        %v1908 = vand.u32 %v1855, 4294901760
        %1909 = vmatmul.f32.gmra.mxu0 %v1908
        %v1910 = vpop.f32.mrf.mxu0
        %v1911 = vadd.f32 %v1885, %v1910
        %1912 = vdwg.mxu0
        %1913 = vmatpush.msra.mxu0 0.0
        %1914 = vmatpush.msra.mxu0 0.0
        %1915 = vmatpush.msra.mxu0 0.0
        %1916 = vmatpush.msra.mxu0 0.0
        %1917 = vmatpush.msra.mxu0 0.0
        %1918 = vmatpush.msra.mxu0 0.0
        %1919 = vmatpush.msra.mxu0 0.0
        %1920 = vmatpush.msra.mxu0 0.0
        %1921 = vmatpush.msra.mxu0 0.0
        %1922 = vmatpush.msra.mxu0 0.0
        %1923 = vmatpush.msra.mxu0 0.0
        %1924 = vmatpush.msra.mxu0 0.0
        %1925 = vmatpush.msra.mxu0 0.0
        %1926 = vmatpush.msra.mxu0 0.0
        %1927 = vmatpush.msra.mxu0 0.0
        %v1928 = vand.u32 %v1859, 4294901760
        %v1929 = vsub.f32 %v1859, %v1928
        %1930 = vmatpush.msra.mxu0 %v1929
        %v1931 = vand.u32 %v1855, 4294901760
        %v1932 = vsub.f32 %v1855, %v1931
        %1933 = vmatmul.f32.gmra.mxu0 %v1932
        %v1934 = vpop.f32.mrf.mxu0
        %v1935 = vadd.f32 %v1911, %v1934
        %1936 = vdwg.mxu0
        %1937 = vmatpush.msra.mxu0 0.0
        %1938 = vmatpush.msra.mxu0 0.0
        %1939 = vmatpush.msra.mxu0 0.0
        %1940 = vmatpush.msra.mxu0 0.0
        %1941 = vmatpush.msra.mxu0 0.0
        %1942 = vmatpush.msra.mxu0 0.0
        %1943 = vmatpush.msra.mxu0 0.0
        %1944 = vmatpush.msra.mxu0 0.0
        %1945 = vmatpush.msra.mxu0 0.0
        %1946 = vmatpush.msra.mxu0 0.0
        %1947 = vmatpush.msra.mxu0 0.0
        %1948 = vmatpush.msra.mxu0 0.0
        %1949 = vmatpush.msra.mxu0 0.0
        %1950 = vmatpush.msra.mxu0 0.0
        %1951 = vmatpush.msra.mxu0 0.0
        %v1952 = vand.u32 %v1859, 4294901760
        %1953 = vmatpush.msra.mxu0 %v1952
        %v1954 = vand.u32 %v1855, 4294901760
        %v1955 = vsub.f32 %v1855, %v1954
        %v1956 = vand.u32 %v1955, 4294901760
        %1957 = vmatmul.f32.gmra.mxu0 %v1956
        %v1958 = vpop.f32.mrf.mxu0
        %v1959 = vadd.f32 %v1935, %v1958
        %1960 = vdwg.mxu0
        %1961 = vmatpush.msra.mxu0 0.0
        %1962 = vmatpush.msra.mxu0 0.0
        %1963 = vmatpush.msra.mxu0 0.0
        %1964 = vmatpush.msra.mxu0 0.0
        %1965 = vmatpush.msra.mxu0 0.0
        %1966 = vmatpush.msra.mxu0 0.0
        %1967 = vmatpush.msra.mxu0 0.0
        %1968 = vmatpush.msra.mxu0 0.0
        %1969 = vmatpush.msra.mxu0 0.0
        %1970 = vmatpush.msra.mxu0 0.0
        %1971 = vmatpush.msra.mxu0 0.0
        %1972 = vmatpush.msra.mxu0 0.0
        %1973 = vmatpush.msra.mxu0 0.0
        %1974 = vmatpush.msra.mxu0 0.0
        %1975 = vmatpush.msra.mxu0 0.0
        %v1976 = vand.u32 %v1859, 4294901760
        %v1977 = vsub.f32 %v1859, %v1976
        %v1978 = vand.u32 %v1977, 4294901760
        %1979 = vmatpush.msra.mxu0 %v1978
        %v1980 = vand.u32 %v1855, 4294901760
        %1981 = vmatmul.f32.gmra.mxu0 %v1980
        %v1982 = vpop.f32.mrf.mxu0
        %v1983 = vadd.f32 %v1959, %v1982
        %1984 = vdwg.mxu0
        %1985 = vmatpush.msra.mxu0 0.0
        %1986 = vmatpush.msra.mxu0 0.0
        %1987 = vmatpush.msra.mxu0 0.0
        %1988 = vmatpush.msra.mxu0 0.0
        %1989 = vmatpush.msra.mxu0 0.0
        %1990 = vmatpush.msra.mxu0 0.0
        %1991 = vmatpush.msra.mxu0 0.0
        %1992 = vmatpush.msra.mxu0 0.0
        %1993 = vmatpush.msra.mxu0 0.0
        %1994 = vmatpush.msra.mxu0 0.0
        %1995 = vmatpush.msra.mxu0 0.0
        %1996 = vmatpush.msra.mxu0 0.0
        %1997 = vmatpush.msra.mxu0 0.0
        %1998 = vmatpush.msra.mxu0 0.0
        %1999 = vmatpush.msra.mxu0 0.0
        %v2000 = vand.u32 %v1859, 4294901760
        %2001 = vmatpush.msra.mxu0 %v2000
        %v2002 = vand.u32 %v1855, 4294901760
        %2003 = vmatmul.f32.gmra.mxu0 %v2002
        %v2004 = vpop.f32.mrf.mxu0
        %v2005 = vadd.f32 %v1983, %v2004
        %2006 = vdwg.mxu0
        %v2007 = vxor.u32 %v2005, 2147483648
        %v2008 = vmul.f32 %v2007, 1.442695
        %v2009 = vpow.pop %v2008
        %v2010 = vadd.f32 %v2009, 1.0
        %v2011 = vrcp.pop %v2010
        %v2012 = vmul.f32 %v2010, %v2011
        %v2013 = vsub.f32 1.0, %v2012
        %v2014 = vmul.f32 %v2011, %v2013
        %v2015 = vadd.f32 %v2011, %v2014
        %vm2016 = vweird.f32 %v2010
        %vm2017 = vweird.f32 %v2011
        %vm2018 = vmor %vm2016, %vm2017
        %v2019 = vsel %vm2018, %v2011, %v2015
        %v2020 = vand.u32 2147483647, %v2010
        %vm2021 = vcmp.eq.f32.partialorder %v2020, 8.507059e+37
        %v2022 = vand.u32 %v2010, 2147483648
        %v2023 = vor.u32 1.1754944e-38, %v2022
        %v2024 = vsel %vm2021, %v2023, %v2019
        %v2025 = vmul.f32 1.0, %v2024
        %v2026 = vld [vmem:[%s4] sm:$0xff]
        %v2027 = vld [vmem:[%s4 + $0x8] sm:$0xff]
        %v2028 = vld [vmem:[%s4 + $0x10] sm:$0xff]
        %v2029 = vld [vmem:[%s4 + $0x18] sm:$0xff]
        %v2030 = vld [vmem:[%s4 + $0x20] sm:$0xff]
        %v2031 = vld [vmem:[%s4 + $0x28] sm:$0xff]
        %v2032 = vld [vmem:[%s4 + $0x30] sm:$0xff]
        %v2033 = vld [vmem:[%s4 + $0x38] sm:$0xff]
        %v2034 = vld [vmem:[%s4 + $0x40] sm:$0xff]
        %v2035 = vld [vmem:[%s4 + $0x48] sm:$0xff]
        %v2036 = vld [vmem:[%s4 + $0x50] sm:$0xff]
        %v2037 = vld [vmem:[%s4 + $0x58] sm:$0xff]
        %v2038 = vld [vmem:[%s4 + $0x60] sm:$0xff]
        %v2039 = vld [vmem:[%s4 + $0x68] sm:$0xff]
        %v2040 = vld [vmem:[%s4 + $0x70] sm:$0xff]
        %v2041 = vld [vmem:[%s4 + $0x78] sm:$0xff]
        %v2043 = vsel %vm1662, %v2025, 0
        %2045 = vmatpush.msra.mxu0 0.0
        %2046 = vmatpush.msra.mxu0 0.0
        %2047 = vmatpush.msra.mxu0 0.0
        %2048 = vmatpush.msra.mxu0 0.0
        %2049 = vmatpush.msra.mxu0 0.0
        %2050 = vmatpush.msra.mxu0 0.0
        %2051 = vmatpush.msra.mxu0 0.0
        %2052 = vmatpush.msra.mxu0 0.0
        %2053 = vmatpush.msra.mxu0 0.0
        %2054 = vmatpush.msra.mxu0 0.0
        %2055 = vmatpush.msra.mxu0 0.0
        %2056 = vmatpush.msra.mxu0 0.0
        %v2057 = vand.u32 %v2038, 4294901760
        %2058 = vmatpush.msra.mxu0 %v2057
        %v2059 = vand.u32 %v2034, 4294901760
        %2060 = vmatpush.msra.mxu0 %v2059
        %v2061 = vand.u32 %v2030, 4294901760
        %2062 = vmatpush.msra.mxu0 %v2061
        %v2063 = vand.u32 %v2026, 4294901760
        %2064 = vmatpush.msra.mxu0 %v2063
        %v2065 = vand.u32 %v2043, 4294901760
        %v2066 = vsub.f32 %v2043, %v2065
        %v2067 = vand.u32 %v2066, 4294901760
        %v2068 = vsub.f32 %v2066, %v2067
        %v2069 = vand.u32 %v2068, 4294901760
        %2070 = vmatmul.f32.gmra.mxu0 %v2069
        %v2071 = vpop.f32.mrf.mxu0
        %v2072 = vadd.f32 0.0, %v2071
        %2073 = vdwg.mxu0
        %2074 = vmatpush.msra.mxu0 0.0
        %2075 = vmatpush.msra.mxu0 0.0
        %2076 = vmatpush.msra.mxu0 0.0
        %2077 = vmatpush.msra.mxu0 0.0
        %2078 = vmatpush.msra.mxu0 0.0
        %2079 = vmatpush.msra.mxu0 0.0
        %2080 = vmatpush.msra.mxu0 0.0
        %2081 = vmatpush.msra.mxu0 0.0
        %2082 = vmatpush.msra.mxu0 0.0
        %2083 = vmatpush.msra.mxu0 0.0
        %2084 = vmatpush.msra.mxu0 0.0
        %2085 = vmatpush.msra.mxu0 0.0
        %v2086 = vand.u32 %v2038, 4294901760
        %v2087 = vsub.f32 %v2038, %v2086
        %v2088 = vand.u32 %v2087, 4294901760
        %v2089 = vsub.f32 %v2087, %v2088
        %v2090 = vand.u32 %v2089, 4294901760
        %2091 = vmatpush.msra.mxu0 %v2090
        %v2092 = vand.u32 %v2034, 4294901760
        %v2093 = vsub.f32 %v2034, %v2092
        %v2094 = vand.u32 %v2093, 4294901760
        %v2095 = vsub.f32 %v2093, %v2094
        %v2096 = vand.u32 %v2095, 4294901760
        %2097 = vmatpush.msra.mxu0 %v2096
        %v2098 = vand.u32 %v2030, 4294901760
        %v2099 = vsub.f32 %v2030, %v2098
        %v2100 = vand.u32 %v2099, 4294901760
        %v2101 = vsub.f32 %v2099, %v2100
        %v2102 = vand.u32 %v2101, 4294901760
        %2103 = vmatpush.msra.mxu0 %v2102
        %v2104 = vand.u32 %v2026, 4294901760
        %v2105 = vsub.f32 %v2026, %v2104
        %v2106 = vand.u32 %v2105, 4294901760
        %v2107 = vsub.f32 %v2105, %v2106
        %v2108 = vand.u32 %v2107, 4294901760
        %2109 = vmatpush.msra.mxu0 %v2108
        %v2110 = vand.u32 %v2043, 4294901760
        %2111 = vmatmul.f32.gmra.mxu0 %v2110
        %v2112 = vpop.f32.mrf.mxu0
        %v2113 = vadd.f32 %v2072, %v2112
        %2114 = vdwg.mxu0
        %2115 = vmatpush.msra.mxu0 0.0
        %2116 = vmatpush.msra.mxu0 0.0
        %2117 = vmatpush.msra.mxu0 0.0
        %2118 = vmatpush.msra.mxu0 0.0
        %2119 = vmatpush.msra.mxu0 0.0
        %2120 = vmatpush.msra.mxu0 0.0
        %2121 = vmatpush.msra.mxu0 0.0
        %2122 = vmatpush.msra.mxu0 0.0
        %2123 = vmatpush.msra.mxu0 0.0
        %2124 = vmatpush.msra.mxu0 0.0
        %2125 = vmatpush.msra.mxu0 0.0
        %2126 = vmatpush.msra.mxu0 0.0
        %v2127 = vand.u32 %v2038, 4294901760
        %v2128 = vsub.f32 %v2038, %v2127
        %2129 = vmatpush.msra.mxu0 %v2128
        %v2130 = vand.u32 %v2034, 4294901760
        %v2131 = vsub.f32 %v2034, %v2130
        %2132 = vmatpush.msra.mxu0 %v2131
        %v2133 = vand.u32 %v2030, 4294901760
        %v2134 = vsub.f32 %v2030, %v2133
        %2135 = vmatpush.msra.mxu0 %v2134
        %v2136 = vand.u32 %v2026, 4294901760
        %v2137 = vsub.f32 %v2026, %v2136
        %2138 = vmatpush.msra.mxu0 %v2137
        %v2139 = vand.u32 %v2043, 4294901760
        %v2140 = vsub.f32 %v2043, %v2139
        %2141 = vmatmul.f32.gmra.mxu0 %v2140
        %v2142 = vpop.f32.mrf.mxu0
        %v2143 = vadd.f32 %v2113, %v2142
        %2144 = vdwg.mxu0
        %2145 = vmatpush.msra.mxu0 0.0
        %2146 = vmatpush.msra.mxu0 0.0
        %2147 = vmatpush.msra.mxu0 0.0
        %2148 = vmatpush.msra.mxu0 0.0
        %2149 = vmatpush.msra.mxu0 0.0
        %2150 = vmatpush.msra.mxu0 0.0
        %2151 = vmatpush.msra.mxu0 0.0
        %2152 = vmatpush.msra.mxu0 0.0
        %2153 = vmatpush.msra.mxu0 0.0
        %2154 = vmatpush.msra.mxu0 0.0
        %2155 = vmatpush.msra.mxu0 0.0
        %2156 = vmatpush.msra.mxu0 0.0
        %v2157 = vand.u32 %v2038, 4294901760
        %2158 = vmatpush.msra.mxu0 %v2157
        %v2159 = vand.u32 %v2034, 4294901760
        %2160 = vmatpush.msra.mxu0 %v2159
        %v2161 = vand.u32 %v2030, 4294901760
        %2162 = vmatpush.msra.mxu0 %v2161
        %v2163 = vand.u32 %v2026, 4294901760
        %2164 = vmatpush.msra.mxu0 %v2163
        %v2165 = vand.u32 %v2043, 4294901760
        %v2166 = vsub.f32 %v2043, %v2165
        %v2167 = vand.u32 %v2166, 4294901760
        %2168 = vmatmul.f32.gmra.mxu0 %v2167
        %v2169 = vpop.f32.mrf.mxu0
        %v2170 = vadd.f32 %v2143, %v2169
        %2171 = vdwg.mxu0
        %2172 = vmatpush.msra.mxu0 0.0
        %2173 = vmatpush.msra.mxu0 0.0
        %2174 = vmatpush.msra.mxu0 0.0
        %2175 = vmatpush.msra.mxu0 0.0
        %2176 = vmatpush.msra.mxu0 0.0
        %2177 = vmatpush.msra.mxu0 0.0
        %2178 = vmatpush.msra.mxu0 0.0
        %2179 = vmatpush.msra.mxu0 0.0
        %2180 = vmatpush.msra.mxu0 0.0
        %2181 = vmatpush.msra.mxu0 0.0
        %2182 = vmatpush.msra.mxu0 0.0
        %2183 = vmatpush.msra.mxu0 0.0
        %v2184 = vand.u32 %v2038, 4294901760
        %v2185 = vsub.f32 %v2038, %v2184
        %v2186 = vand.u32 %v2185, 4294901760
        %2187 = vmatpush.msra.mxu0 %v2186
        %v2188 = vand.u32 %v2034, 4294901760
        %v2189 = vsub.f32 %v2034, %v2188
        %v2190 = vand.u32 %v2189, 4294901760
        %2191 = vmatpush.msra.mxu0 %v2190
        %v2192 = vand.u32 %v2030, 4294901760
        %v2193 = vsub.f32 %v2030, %v2192
        %v2194 = vand.u32 %v2193, 4294901760
        %2195 = vmatpush.msra.mxu0 %v2194
        %v2196 = vand.u32 %v2026, 4294901760
        %v2197 = vsub.f32 %v2026, %v2196
        %v2198 = vand.u32 %v2197, 4294901760
        %2199 = vmatpush.msra.mxu0 %v2198
        %v2200 = vand.u32 %v2043, 4294901760
        %2201 = vmatmul.f32.gmra.mxu0 %v2200
        %v2202 = vpop.f32.mrf.mxu0
        %v2203 = vadd.f32 %v2170, %v2202
        %2204 = vdwg.mxu0
        %2205 = vmatpush.msra.mxu0 0.0
        %2206 = vmatpush.msra.mxu0 0.0
        %2207 = vmatpush.msra.mxu0 0.0
        %2208 = vmatpush.msra.mxu0 0.0
        %2209 = vmatpush.msra.mxu0 0.0
        %2210 = vmatpush.msra.mxu0 0.0
        %2211 = vmatpush.msra.mxu0 0.0
        %2212 = vmatpush.msra.mxu0 0.0
        %2213 = vmatpush.msra.mxu0 0.0
        %2214 = vmatpush.msra.mxu0 0.0
        %2215 = vmatpush.msra.mxu0 0.0
        %2216 = vmatpush.msra.mxu0 0.0
        %v2217 = vand.u32 %v2038, 4294901760
        %2218 = vmatpush.msra.mxu0 %v2217
        %v2219 = vand.u32 %v2034, 4294901760
        %2220 = vmatpush.msra.mxu0 %v2219
        %v2221 = vand.u32 %v2030, 4294901760
        %2222 = vmatpush.msra.mxu0 %v2221
        %v2223 = vand.u32 %v2026, 4294901760
        %2224 = vmatpush.msra.mxu0 %v2223
        %v2225 = vand.u32 %v2043, 4294901760
        %2226 = vmatmul.f32.gmra.mxu0 %v2225
        %v2227 = vpop.f32.mrf.mxu0
        %v2228 = vadd.f32 %v2203, %v2227
        %2229 = vdwg.mxu0
        %2230 = vmatpush.msra.mxu0 0.0
        %2231 = vmatpush.msra.mxu0 0.0
        %2232 = vmatpush.msra.mxu0 0.0
        %2233 = vmatpush.msra.mxu0 0.0
        %2234 = vmatpush.msra.mxu0 0.0
        %2235 = vmatpush.msra.mxu0 0.0
        %2236 = vmatpush.msra.mxu0 0.0
        %2237 = vmatpush.msra.mxu0 0.0
        %2238 = vmatpush.msra.mxu0 0.0
        %2239 = vmatpush.msra.mxu0 0.0
        %2240 = vmatpush.msra.mxu0 0.0
        %2241 = vmatpush.msra.mxu0 0.0
        %v2242 = vand.u32 %v2039, 4294901760
        %2243 = vmatpush.msra.mxu0 %v2242
        %v2244 = vand.u32 %v2035, 4294901760
        %2245 = vmatpush.msra.mxu0 %v2244
        %v2246 = vand.u32 %v2031, 4294901760
        %2247 = vmatpush.msra.mxu0 %v2246
        %v2248 = vand.u32 %v2027, 4294901760
        %2249 = vmatpush.msra.mxu0 %v2248
        %v2250 = vand.u32 %v2043, 4294901760
        %v2251 = vsub.f32 %v2043, %v2250
        %v2252 = vand.u32 %v2251, 4294901760
        %v2253 = vsub.f32 %v2251, %v2252
        %v2254 = vand.u32 %v2253, 4294901760
        %2255 = vmatmul.f32.gmra.mxu0 %v2254
        %v2256 = vpop.f32.mrf.mxu0
        %v2257 = vadd.f32 0.0, %v2256
        %2258 = vdwg.mxu0
        %2259 = vmatpush.msra.mxu0 0.0
        %2260 = vmatpush.msra.mxu0 0.0
        %2261 = vmatpush.msra.mxu0 0.0
        %2262 = vmatpush.msra.mxu0 0.0
        %2263 = vmatpush.msra.mxu0 0.0
        %2264 = vmatpush.msra.mxu0 0.0
        %2265 = vmatpush.msra.mxu0 0.0
        %2266 = vmatpush.msra.mxu0 0.0
        %2267 = vmatpush.msra.mxu0 0.0
        %2268 = vmatpush.msra.mxu0 0.0
        %2269 = vmatpush.msra.mxu0 0.0
        %2270 = vmatpush.msra.mxu0 0.0
        %v2271 = vand.u32 %v2039, 4294901760
        %v2272 = vsub.f32 %v2039, %v2271
        %v2273 = vand.u32 %v2272, 4294901760
        %v2274 = vsub.f32 %v2272, %v2273
        %v2275 = vand.u32 %v2274, 4294901760
        %2276 = vmatpush.msra.mxu0 %v2275
        %v2277 = vand.u32 %v2035, 4294901760
        %v2278 = vsub.f32 %v2035, %v2277
        %v2279 = vand.u32 %v2278, 4294901760
        %v2280 = vsub.f32 %v2278, %v2279
        %v2281 = vand.u32 %v2280, 4294901760
        %2282 = vmatpush.msra.mxu0 %v2281
        %v2283 = vand.u32 %v2031, 4294901760
        %v2284 = vsub.f32 %v2031, %v2283
        %v2285 = vand.u32 %v2284, 4294901760
        %v2286 = vsub.f32 %v2284, %v2285
        %v2287 = vand.u32 %v2286, 4294901760
        %2288 = vmatpush.msra.mxu0 %v2287
        %v2289 = vand.u32 %v2027, 4294901760
        %v2290 = vsub.f32 %v2027, %v2289
        %v2291 = vand.u32 %v2290, 4294901760
        %v2292 = vsub.f32 %v2290, %v2291
        %v2293 = vand.u32 %v2292, 4294901760
        %2294 = vmatpush.msra.mxu0 %v2293
        %v2295 = vand.u32 %v2043, 4294901760
        %2296 = vmatmul.f32.gmra.mxu0 %v2295
        %v2297 = vpop.f32.mrf.mxu0
        %v2298 = vadd.f32 %v2257, %v2297
        %2299 = vdwg.mxu0
        %2300 = vmatpush.msra.mxu0 0.0
        %2301 = vmatpush.msra.mxu0 0.0
        %2302 = vmatpush.msra.mxu0 0.0
        %2303 = vmatpush.msra.mxu0 0.0
        %2304 = vmatpush.msra.mxu0 0.0
        %2305 = vmatpush.msra.mxu0 0.0
        %2306 = vmatpush.msra.mxu0 0.0
        %2307 = vmatpush.msra.mxu0 0.0
        %2308 = vmatpush.msra.mxu0 0.0
        %2309 = vmatpush.msra.mxu0 0.0
        %2310 = vmatpush.msra.mxu0 0.0
        %2311 = vmatpush.msra.mxu0 0.0
        %v2312 = vand.u32 %v2039, 4294901760
        %v2313 = vsub.f32 %v2039, %v2312
        %2314 = vmatpush.msra.mxu0 %v2313
        %v2315 = vand.u32 %v2035, 4294901760
        %v2316 = vsub.f32 %v2035, %v2315
        %2317 = vmatpush.msra.mxu0 %v2316
        %v2318 = vand.u32 %v2031, 4294901760
        %v2319 = vsub.f32 %v2031, %v2318
        %2320 = vmatpush.msra.mxu0 %v2319
        %v2321 = vand.u32 %v2027, 4294901760
        %v2322 = vsub.f32 %v2027, %v2321
        %2323 = vmatpush.msra.mxu0 %v2322
        %v2324 = vand.u32 %v2043, 4294901760
        %v2325 = vsub.f32 %v2043, %v2324
        %2326 = vmatmul.f32.gmra.mxu0 %v2325
        %v2327 = vpop.f32.mrf.mxu0
        %v2328 = vadd.f32 %v2298, %v2327
        %2329 = vdwg.mxu0
        %2330 = vmatpush.msra.mxu0 0.0
        %2331 = vmatpush.msra.mxu0 0.0
        %2332 = vmatpush.msra.mxu0 0.0
        %2333 = vmatpush.msra.mxu0 0.0
        %2334 = vmatpush.msra.mxu0 0.0
        %2335 = vmatpush.msra.mxu0 0.0
        %2336 = vmatpush.msra.mxu0 0.0
        %2337 = vmatpush.msra.mxu0 0.0
        %2338 = vmatpush.msra.mxu0 0.0
        %2339 = vmatpush.msra.mxu0 0.0
        %2340 = vmatpush.msra.mxu0 0.0
        %2341 = vmatpush.msra.mxu0 0.0
        %v2342 = vand.u32 %v2039, 4294901760
        %2343 = vmatpush.msra.mxu0 %v2342
        %v2344 = vand.u32 %v2035, 4294901760
        %2345 = vmatpush.msra.mxu0 %v2344
        %v2346 = vand.u32 %v2031, 4294901760
        %2347 = vmatpush.msra.mxu0 %v2346
        %v2348 = vand.u32 %v2027, 4294901760
        %2349 = vmatpush.msra.mxu0 %v2348
        %v2350 = vand.u32 %v2043, 4294901760
        %v2351 = vsub.f32 %v2043, %v2350
        %v2352 = vand.u32 %v2351, 4294901760
        %2353 = vmatmul.f32.gmra.mxu0 %v2352
        %v2354 = vpop.f32.mrf.mxu0
        %v2355 = vadd.f32 %v2328, %v2354
        %2356 = vdwg.mxu0
        %2357 = vmatpush.msra.mxu0 0.0
        %2358 = vmatpush.msra.mxu0 0.0
        %2359 = vmatpush.msra.mxu0 0.0
        %2360 = vmatpush.msra.mxu0 0.0
        %2361 = vmatpush.msra.mxu0 0.0
        %2362 = vmatpush.msra.mxu0 0.0
        %2363 = vmatpush.msra.mxu0 0.0
        %2364 = vmatpush.msra.mxu0 0.0
        %2365 = vmatpush.msra.mxu0 0.0
        %2366 = vmatpush.msra.mxu0 0.0
        %2367 = vmatpush.msra.mxu0 0.0
        %2368 = vmatpush.msra.mxu0 0.0
        %v2369 = vand.u32 %v2039, 4294901760
        %v2370 = vsub.f32 %v2039, %v2369
        %v2371 = vand.u32 %v2370, 4294901760
        %2372 = vmatpush.msra.mxu0 %v2371
        %v2373 = vand.u32 %v2035, 4294901760
        %v2374 = vsub.f32 %v2035, %v2373
        %v2375 = vand.u32 %v2374, 4294901760
        %2376 = vmatpush.msra.mxu0 %v2375
        %v2377 = vand.u32 %v2031, 4294901760
        %v2378 = vsub.f32 %v2031, %v2377
        %v2379 = vand.u32 %v2378, 4294901760
        %2380 = vmatpush.msra.mxu0 %v2379
        %v2381 = vand.u32 %v2027, 4294901760
        %v2382 = vsub.f32 %v2027, %v2381
        %v2383 = vand.u32 %v2382, 4294901760
        %2384 = vmatpush.msra.mxu0 %v2383
        %v2385 = vand.u32 %v2043, 4294901760
        %2386 = vmatmul.f32.gmra.mxu0 %v2385
        %v2387 = vpop.f32.mrf.mxu0
        %v2388 = vadd.f32 %v2355, %v2387
        %2389 = vdwg.mxu0
        %2390 = vmatpush.msra.mxu0 0.0
        %2391 = vmatpush.msra.mxu0 0.0
        %2392 = vmatpush.msra.mxu0 0.0
        %2393 = vmatpush.msra.mxu0 0.0
        %2394 = vmatpush.msra.mxu0 0.0
        %2395 = vmatpush.msra.mxu0 0.0
        %2396 = vmatpush.msra.mxu0 0.0
        %2397 = vmatpush.msra.mxu0 0.0
        %2398 = vmatpush.msra.mxu0 0.0
        %2399 = vmatpush.msra.mxu0 0.0
        %2400 = vmatpush.msra.mxu0 0.0
        %2401 = vmatpush.msra.mxu0 0.0
        %v2402 = vand.u32 %v2039, 4294901760
        %2403 = vmatpush.msra.mxu0 %v2402
        %v2404 = vand.u32 %v2035, 4294901760
        %2405 = vmatpush.msra.mxu0 %v2404
        %v2406 = vand.u32 %v2031, 4294901760
        %2407 = vmatpush.msra.mxu0 %v2406
        %v2408 = vand.u32 %v2027, 4294901760
        %2409 = vmatpush.msra.mxu0 %v2408
        %v2410 = vand.u32 %v2043, 4294901760
        %2411 = vmatmul.f32.gmra.mxu0 %v2410
        %v2412 = vpop.f32.mrf.mxu0
        %v2413 = vadd.f32 %v2388, %v2412
        %2414 = vdwg.mxu0
        %2415 = vmatpush.msra.mxu0 0.0
        %2416 = vmatpush.msra.mxu0 0.0
        %2417 = vmatpush.msra.mxu0 0.0
        %2418 = vmatpush.msra.mxu0 0.0
        %2419 = vmatpush.msra.mxu0 0.0
        %2420 = vmatpush.msra.mxu0 0.0
        %2421 = vmatpush.msra.mxu0 0.0
        %2422 = vmatpush.msra.mxu0 0.0
        %2423 = vmatpush.msra.mxu0 0.0
        %2424 = vmatpush.msra.mxu0 0.0
        %2425 = vmatpush.msra.mxu0 0.0
        %2426 = vmatpush.msra.mxu0 0.0
        %v2427 = vand.u32 %v2040, 4294901760
        %2428 = vmatpush.msra.mxu0 %v2427
        %v2429 = vand.u32 %v2036, 4294901760
        %2430 = vmatpush.msra.mxu0 %v2429
        %v2431 = vand.u32 %v2032, 4294901760
        %2432 = vmatpush.msra.mxu0 %v2431
        %v2433 = vand.u32 %v2028, 4294901760
        %2434 = vmatpush.msra.mxu0 %v2433
        %v2435 = vand.u32 %v2043, 4294901760
        %v2436 = vsub.f32 %v2043, %v2435
        %v2437 = vand.u32 %v2436, 4294901760
        %v2438 = vsub.f32 %v2436, %v2437
        %v2439 = vand.u32 %v2438, 4294901760
        %2440 = vmatmul.f32.gmra.mxu0 %v2439
        %v2441 = vpop.f32.mrf.mxu0
        %v2442 = vadd.f32 0.0, %v2441
        %2443 = vdwg.mxu0
        %2444 = vmatpush.msra.mxu0 0.0
        %2445 = vmatpush.msra.mxu0 0.0
        %2446 = vmatpush.msra.mxu0 0.0
        %2447 = vmatpush.msra.mxu0 0.0
        %2448 = vmatpush.msra.mxu0 0.0
        %2449 = vmatpush.msra.mxu0 0.0
        %2450 = vmatpush.msra.mxu0 0.0
        %2451 = vmatpush.msra.mxu0 0.0
        %2452 = vmatpush.msra.mxu0 0.0
        %2453 = vmatpush.msra.mxu0 0.0
        %2454 = vmatpush.msra.mxu0 0.0
        %2455 = vmatpush.msra.mxu0 0.0
        %v2456 = vand.u32 %v2040, 4294901760
        %v2457 = vsub.f32 %v2040, %v2456
        %v2458 = vand.u32 %v2457, 4294901760
        %v2459 = vsub.f32 %v2457, %v2458
        %v2460 = vand.u32 %v2459, 4294901760
        %2461 = vmatpush.msra.mxu0 %v2460
        %v2462 = vand.u32 %v2036, 4294901760
        %v2463 = vsub.f32 %v2036, %v2462
        %v2464 = vand.u32 %v2463, 4294901760
        %v2465 = vsub.f32 %v2463, %v2464
        %v2466 = vand.u32 %v2465, 4294901760
        %2467 = vmatpush.msra.mxu0 %v2466
        %v2468 = vand.u32 %v2032, 4294901760
        %v2469 = vsub.f32 %v2032, %v2468
        %v2470 = vand.u32 %v2469, 4294901760
        %v2471 = vsub.f32 %v2469, %v2470
        %v2472 = vand.u32 %v2471, 4294901760
        %2473 = vmatpush.msra.mxu0 %v2472
        %v2474 = vand.u32 %v2028, 4294901760
        %v2475 = vsub.f32 %v2028, %v2474
        %v2476 = vand.u32 %v2475, 4294901760
        %v2477 = vsub.f32 %v2475, %v2476
        %v2478 = vand.u32 %v2477, 4294901760
        %2479 = vmatpush.msra.mxu0 %v2478
        %v2480 = vand.u32 %v2043, 4294901760
        %2481 = vmatmul.f32.gmra.mxu0 %v2480
        %v2482 = vpop.f32.mrf.mxu0
        %v2483 = vadd.f32 %v2442, %v2482
        %2484 = vdwg.mxu0
        %2485 = vmatpush.msra.mxu0 0.0
        %2486 = vmatpush.msra.mxu0 0.0
        %2487 = vmatpush.msra.mxu0 0.0
        %2488 = vmatpush.msra.mxu0 0.0
        %2489 = vmatpush.msra.mxu0 0.0
        %2490 = vmatpush.msra.mxu0 0.0
        %2491 = vmatpush.msra.mxu0 0.0
        %2492 = vmatpush.msra.mxu0 0.0
        %2493 = vmatpush.msra.mxu0 0.0
        %2494 = vmatpush.msra.mxu0 0.0
        %2495 = vmatpush.msra.mxu0 0.0
        %2496 = vmatpush.msra.mxu0 0.0
        %v2497 = vand.u32 %v2040, 4294901760
        %v2498 = vsub.f32 %v2040, %v2497
        %2499 = vmatpush.msra.mxu0 %v2498
        %v2500 = vand.u32 %v2036, 4294901760
        %v2501 = vsub.f32 %v2036, %v2500
        %2502 = vmatpush.msra.mxu0 %v2501
        %v2503 = vand.u32 %v2032, 4294901760
        %v2504 = vsub.f32 %v2032, %v2503
        %2505 = vmatpush.msra.mxu0 %v2504
        %v2506 = vand.u32 %v2028, 4294901760
        %v2507 = vsub.f32 %v2028, %v2506
        %2508 = vmatpush.msra.mxu0 %v2507
        %v2509 = vand.u32 %v2043, 4294901760
        %v2510 = vsub.f32 %v2043, %v2509
        %2511 = vmatmul.f32.gmra.mxu0 %v2510
        %v2512 = vpop.f32.mrf.mxu0
        %v2513 = vadd.f32 %v2483, %v2512
        %2514 = vdwg.mxu0
        %2515 = vmatpush.msra.mxu0 0.0
        %2516 = vmatpush.msra.mxu0 0.0
        %2517 = vmatpush.msra.mxu0 0.0
        %2518 = vmatpush.msra.mxu0 0.0
        %2519 = vmatpush.msra.mxu0 0.0
        %2520 = vmatpush.msra.mxu0 0.0
        %2521 = vmatpush.msra.mxu0 0.0
        %2522 = vmatpush.msra.mxu0 0.0
        %2523 = vmatpush.msra.mxu0 0.0
        %2524 = vmatpush.msra.mxu0 0.0
        %2525 = vmatpush.msra.mxu0 0.0
        %2526 = vmatpush.msra.mxu0 0.0
        %v2527 = vand.u32 %v2040, 4294901760
        %2528 = vmatpush.msra.mxu0 %v2527
        %v2529 = vand.u32 %v2036, 4294901760
        %2530 = vmatpush.msra.mxu0 %v2529
        %v2531 = vand.u32 %v2032, 4294901760
        %2532 = vmatpush.msra.mxu0 %v2531
        %v2533 = vand.u32 %v2028, 4294901760
        %2534 = vmatpush.msra.mxu0 %v2533
        %v2535 = vand.u32 %v2043, 4294901760
        %v2536 = vsub.f32 %v2043, %v2535
        %v2537 = vand.u32 %v2536, 4294901760
        %2538 = vmatmul.f32.gmra.mxu0 %v2537
        %v2539 = vpop.f32.mrf.mxu0
        %v2540 = vadd.f32 %v2513, %v2539
        %2541 = vdwg.mxu0
        %2542 = vmatpush.msra.mxu0 0.0
        %2543 = vmatpush.msra.mxu0 0.0
        %2544 = vmatpush.msra.mxu0 0.0
        %2545 = vmatpush.msra.mxu0 0.0
        %2546 = vmatpush.msra.mxu0 0.0
        %2547 = vmatpush.msra.mxu0 0.0
        %2548 = vmatpush.msra.mxu0 0.0
        %2549 = vmatpush.msra.mxu0 0.0
        %2550 = vmatpush.msra.mxu0 0.0
        %2551 = vmatpush.msra.mxu0 0.0
        %2552 = vmatpush.msra.mxu0 0.0
        %2553 = vmatpush.msra.mxu0 0.0
        %v2554 = vand.u32 %v2040, 4294901760
        %v2555 = vsub.f32 %v2040, %v2554
        %v2556 = vand.u32 %v2555, 4294901760
        %2557 = vmatpush.msra.mxu0 %v2556
        %v2558 = vand.u32 %v2036, 4294901760
        %v2559 = vsub.f32 %v2036, %v2558
        %v2560 = vand.u32 %v2559, 4294901760
        %2561 = vmatpush.msra.mxu0 %v2560
        %v2562 = vand.u32 %v2032, 4294901760
        %v2563 = vsub.f32 %v2032, %v2562
        %v2564 = vand.u32 %v2563, 4294901760
        %2565 = vmatpush.msra.mxu0 %v2564
        %v2566 = vand.u32 %v2028, 4294901760
        %v2567 = vsub.f32 %v2028, %v2566
        %v2568 = vand.u32 %v2567, 4294901760
        %2569 = vmatpush.msra.mxu0 %v2568
        %v2570 = vand.u32 %v2043, 4294901760
        %2571 = vmatmul.f32.gmra.mxu0 %v2570
        %v2572 = vpop.f32.mrf.mxu0
        %v2573 = vadd.f32 %v2540, %v2572
        %2574 = vdwg.mxu0
        %2575 = vmatpush.msra.mxu0 0.0
        %2576 = vmatpush.msra.mxu0 0.0
        %2577 = vmatpush.msra.mxu0 0.0
        %2578 = vmatpush.msra.mxu0 0.0
        %2579 = vmatpush.msra.mxu0 0.0
        %2580 = vmatpush.msra.mxu0 0.0
        %2581 = vmatpush.msra.mxu0 0.0
        %2582 = vmatpush.msra.mxu0 0.0
        %2583 = vmatpush.msra.mxu0 0.0
        %2584 = vmatpush.msra.mxu0 0.0
        %2585 = vmatpush.msra.mxu0 0.0
        %2586 = vmatpush.msra.mxu0 0.0
        %v2587 = vand.u32 %v2040, 4294901760
        %2588 = vmatpush.msra.mxu0 %v2587
        %v2589 = vand.u32 %v2036, 4294901760
        %2590 = vmatpush.msra.mxu0 %v2589
        %v2591 = vand.u32 %v2032, 4294901760
        %2592 = vmatpush.msra.mxu0 %v2591
        %v2593 = vand.u32 %v2028, 4294901760
        %2594 = vmatpush.msra.mxu0 %v2593
        %v2595 = vand.u32 %v2043, 4294901760
        %2596 = vmatmul.f32.gmra.mxu0 %v2595
        %v2597 = vpop.f32.mrf.mxu0
        %v2598 = vadd.f32 %v2573, %v2597
        %2599 = vdwg.mxu0
        %2600 = vmatpush.msra.mxu0 0.0
        %2601 = vmatpush.msra.mxu0 0.0
        %2602 = vmatpush.msra.mxu0 0.0
        %2603 = vmatpush.msra.mxu0 0.0
        %2604 = vmatpush.msra.mxu0 0.0
        %2605 = vmatpush.msra.mxu0 0.0
        %2606 = vmatpush.msra.mxu0 0.0
        %2607 = vmatpush.msra.mxu0 0.0
        %2608 = vmatpush.msra.mxu0 0.0
        %2609 = vmatpush.msra.mxu0 0.0
        %2610 = vmatpush.msra.mxu0 0.0
        %2611 = vmatpush.msra.mxu0 0.0
        %v2612 = vand.u32 %v2041, 4294901760
        %2613 = vmatpush.msra.mxu0 %v2612
        %v2614 = vand.u32 %v2037, 4294901760
        %2615 = vmatpush.msra.mxu0 %v2614
        %v2616 = vand.u32 %v2033, 4294901760
        %2617 = vmatpush.msra.mxu0 %v2616
        %v2618 = vand.u32 %v2029, 4294901760
        %2619 = vmatpush.msra.mxu0 %v2618
        %v2620 = vand.u32 %v2043, 4294901760
        %v2621 = vsub.f32 %v2043, %v2620
        %v2622 = vand.u32 %v2621, 4294901760
        %v2623 = vsub.f32 %v2621, %v2622
        %v2624 = vand.u32 %v2623, 4294901760
        %2625 = vmatmul.f32.gmra.mxu0 %v2624
        %v2626 = vpop.f32.mrf.mxu0
        %v2627 = vadd.f32 0.0, %v2626
        %2628 = vdwg.mxu0
        %2629 = vmatpush.msra.mxu0 0.0
        %2630 = vmatpush.msra.mxu0 0.0
        %2631 = vmatpush.msra.mxu0 0.0
        %2632 = vmatpush.msra.mxu0 0.0
        %2633 = vmatpush.msra.mxu0 0.0
        %2634 = vmatpush.msra.mxu0 0.0
        %2635 = vmatpush.msra.mxu0 0.0
        %2636 = vmatpush.msra.mxu0 0.0
        %2637 = vmatpush.msra.mxu0 0.0
        %2638 = vmatpush.msra.mxu0 0.0
        %2639 = vmatpush.msra.mxu0 0.0
        %2640 = vmatpush.msra.mxu0 0.0
        %v2641 = vand.u32 %v2041, 4294901760
        %v2642 = vsub.f32 %v2041, %v2641
        %v2643 = vand.u32 %v2642, 4294901760
        %v2644 = vsub.f32 %v2642, %v2643
        %v2645 = vand.u32 %v2644, 4294901760
        %2646 = vmatpush.msra.mxu0 %v2645
        %v2647 = vand.u32 %v2037, 4294901760
        %v2648 = vsub.f32 %v2037, %v2647
        %v2649 = vand.u32 %v2648, 4294901760
        %v2650 = vsub.f32 %v2648, %v2649
        %v2651 = vand.u32 %v2650, 4294901760
        %2652 = vmatpush.msra.mxu0 %v2651
        %v2653 = vand.u32 %v2033, 4294901760
        %v2654 = vsub.f32 %v2033, %v2653
        %v2655 = vand.u32 %v2654, 4294901760
        %v2656 = vsub.f32 %v2654, %v2655
        %v2657 = vand.u32 %v2656, 4294901760
        %2658 = vmatpush.msra.mxu0 %v2657
        %v2659 = vand.u32 %v2029, 4294901760
        %v2660 = vsub.f32 %v2029, %v2659
        %v2661 = vand.u32 %v2660, 4294901760
        %v2662 = vsub.f32 %v2660, %v2661
        %v2663 = vand.u32 %v2662, 4294901760
        %2664 = vmatpush.msra.mxu0 %v2663
        %v2665 = vand.u32 %v2043, 4294901760
        %2666 = vmatmul.f32.gmra.mxu0 %v2665
        %v2667 = vpop.f32.mrf.mxu0
        %v2668 = vadd.f32 %v2627, %v2667
        %2669 = vdwg.mxu0
        %2670 = vmatpush.msra.mxu0 0.0
        %2671 = vmatpush.msra.mxu0 0.0
        %2672 = vmatpush.msra.mxu0 0.0
        %2673 = vmatpush.msra.mxu0 0.0
        %2674 = vmatpush.msra.mxu0 0.0
        %2675 = vmatpush.msra.mxu0 0.0
        %2676 = vmatpush.msra.mxu0 0.0
        %2677 = vmatpush.msra.mxu0 0.0
        %2678 = vmatpush.msra.mxu0 0.0
        %2679 = vmatpush.msra.mxu0 0.0
        %2680 = vmatpush.msra.mxu0 0.0
        %2681 = vmatpush.msra.mxu0 0.0
        %v2682 = vand.u32 %v2041, 4294901760
        %v2683 = vsub.f32 %v2041, %v2682
        %2684 = vmatpush.msra.mxu0 %v2683
        %v2685 = vand.u32 %v2037, 4294901760
        %v2686 = vsub.f32 %v2037, %v2685
        %2687 = vmatpush.msra.mxu0 %v2686
        %v2688 = vand.u32 %v2033, 4294901760
        %v2689 = vsub.f32 %v2033, %v2688
        %2690 = vmatpush.msra.mxu0 %v2689
        %v2691 = vand.u32 %v2029, 4294901760
        %v2692 = vsub.f32 %v2029, %v2691
        %2693 = vmatpush.msra.mxu0 %v2692
        %v2694 = vand.u32 %v2043, 4294901760
        %v2695 = vsub.f32 %v2043, %v2694
        %2696 = vmatmul.f32.gmra.mxu0 %v2695
        %v2697 = vpop.f32.mrf.mxu0
        %v2698 = vadd.f32 %v2668, %v2697
        %2699 = vdwg.mxu0
        %2700 = vmatpush.msra.mxu0 0.0
        %2701 = vmatpush.msra.mxu0 0.0
        %2702 = vmatpush.msra.mxu0 0.0
        %2703 = vmatpush.msra.mxu0 0.0
        %2704 = vmatpush.msra.mxu0 0.0
        %2705 = vmatpush.msra.mxu0 0.0
        %2706 = vmatpush.msra.mxu0 0.0
        %2707 = vmatpush.msra.mxu0 0.0
        %2708 = vmatpush.msra.mxu0 0.0
        %2709 = vmatpush.msra.mxu0 0.0
        %2710 = vmatpush.msra.mxu0 0.0
        %2711 = vmatpush.msra.mxu0 0.0
        %v2712 = vand.u32 %v2041, 4294901760
        %2713 = vmatpush.msra.mxu0 %v2712
        %v2714 = vand.u32 %v2037, 4294901760
        %2715 = vmatpush.msra.mxu0 %v2714
        %v2716 = vand.u32 %v2033, 4294901760
        %2717 = vmatpush.msra.mxu0 %v2716
        %v2718 = vand.u32 %v2029, 4294901760
        %2719 = vmatpush.msra.mxu0 %v2718
        %v2720 = vand.u32 %v2043, 4294901760
        %v2721 = vsub.f32 %v2043, %v2720
        %v2722 = vand.u32 %v2721, 4294901760
        %2723 = vmatmul.f32.gmra.mxu0 %v2722
        %v2724 = vpop.f32.mrf.mxu0
        %v2725 = vadd.f32 %v2698, %v2724
        %2726 = vdwg.mxu0
        %2727 = vmatpush.msra.mxu0 0.0
        %2728 = vmatpush.msra.mxu0 0.0
        %2729 = vmatpush.msra.mxu0 0.0
        %2730 = vmatpush.msra.mxu0 0.0
        %2731 = vmatpush.msra.mxu0 0.0
        %2732 = vmatpush.msra.mxu0 0.0
        %2733 = vmatpush.msra.mxu0 0.0
        %2734 = vmatpush.msra.mxu0 0.0
        %2735 = vmatpush.msra.mxu0 0.0
        %2736 = vmatpush.msra.mxu0 0.0
        %2737 = vmatpush.msra.mxu0 0.0
        %2738 = vmatpush.msra.mxu0 0.0
        %v2739 = vand.u32 %v2041, 4294901760
        %v2740 = vsub.f32 %v2041, %v2739
        %v2741 = vand.u32 %v2740, 4294901760
        %2742 = vmatpush.msra.mxu0 %v2741
        %v2743 = vand.u32 %v2037, 4294901760
        %v2744 = vsub.f32 %v2037, %v2743
        %v2745 = vand.u32 %v2744, 4294901760
        %2746 = vmatpush.msra.mxu0 %v2745
        %v2747 = vand.u32 %v2033, 4294901760
        %v2748 = vsub.f32 %v2033, %v2747
        %v2749 = vand.u32 %v2748, 4294901760
        %2750 = vmatpush.msra.mxu0 %v2749
        %v2751 = vand.u32 %v2029, 4294901760
        %v2752 = vsub.f32 %v2029, %v2751
        %v2753 = vand.u32 %v2752, 4294901760
        %2754 = vmatpush.msra.mxu0 %v2753
        %v2755 = vand.u32 %v2043, 4294901760
        %2756 = vmatmul.f32.gmra.mxu0 %v2755
        %v2757 = vpop.f32.mrf.mxu0
        %v2758 = vadd.f32 %v2725, %v2757
        %2759 = vdwg.mxu0
        %2760 = vmatpush.msra.mxu0 0.0
        %2761 = vmatpush.msra.mxu0 0.0
        %2762 = vmatpush.msra.mxu0 0.0
        %2763 = vmatpush.msra.mxu0 0.0
        %2764 = vmatpush.msra.mxu0 0.0
        %2765 = vmatpush.msra.mxu0 0.0
        %2766 = vmatpush.msra.mxu0 0.0
        %2767 = vmatpush.msra.mxu0 0.0
        %2768 = vmatpush.msra.mxu0 0.0
        %2769 = vmatpush.msra.mxu0 0.0
        %2770 = vmatpush.msra.mxu0 0.0
        %2771 = vmatpush.msra.mxu0 0.0
        %v2772 = vand.u32 %v2041, 4294901760
        %2773 = vmatpush.msra.mxu0 %v2772
        %v2774 = vand.u32 %v2037, 4294901760
        %2775 = vmatpush.msra.mxu0 %v2774
        %v2776 = vand.u32 %v2033, 4294901760
        %2777 = vmatpush.msra.mxu0 %v2776
        %v2778 = vand.u32 %v2029, 4294901760
        %2779 = vmatpush.msra.mxu0 %v2778
        %v2780 = vand.u32 %v2043, 4294901760
        %2781 = vmatmul.f32.gmra.mxu0 %v2780
        %v2782 = vpop.f32.mrf.mxu0
        %v2783 = vadd.f32 %v2758, %v2782
        %2784 = vdwg.mxu0
        %v2789 = vrot.slane %v2413, 7
        %v2790 = vrot.slane %v2598, 6
        %v2791 = vrot.slane %v2783, 5
        %vm2792 = vcmask 1040384
        %v2793 = vsel %vm2792, %v2228, %v2789
        %vm2794 = vcmask 1042434
        %v2795 = vsel %vm2794, %v2790, %v2791
        %v2796 = vsel %vm1857, %v2793, %v2795
        %v2798 = vmul.f32 %v220, %v2796
        %v2799 = vlaneseq
        %vm2800 = vcmp.ge.s32.totalorder %v2799, 0
        %vm2801 = vcmp.lt.s32.totalorder %v2799, 512
        %vm2802 = vmand %vm2800, %vm2801
        %2803 = vst.msk [vmem:[%s215] sm:$0xf] %vm2802, %v2798
        %s2804 = sand.u32 %s137, 1
        %s2805 = scalar_lea.sflag [#allocation3], %s2804
        %s2806 = sand.u32 %s137, 1
        %s2807 = smul.addr %s2806, 4
        %s2808 = scalar_lea.vmem [#allocation2], %s2807
        // Predicated region
        $region41: #{tpu_custom_call.1} parent=39 // pred_check
          %p2809 = pneg %p147
        $region42: #{tpu_custom_call.1} parent=39 // pred_check_branch
          %2811 = sbr.rel (%p2809) target = $region44
        $region43: #{tpu_custom_call.1} parent=39 // pred_region
          %2813 = vsyncadd %s2805, 0
          %s2814 = smul.addr %s19, 4
          %s2815 = scalar_lea.hbm %s5, %s2814
          %s2817 = sshll.u32 %s2808, 4
          %s2818 = int_to_ptr.vmem [resolvable:$true] %s2817
          %s2819 = sshll.u32 %s2815, 4
          %s2820 = int_to_ptr.hbm [resolvable:$true] %s2819
          %2822 = dma.vmem_to_hbm [thread:$0]  %s2818, 64, %s2820, %s2805
        $region44: #{tpu_custom_call.1} parent=39 // pred_fallthru
          _
      $region40: #{tpu_custom_call.1} parent=5 // pred_fallthru
        _
      %p2823 = scmp.le.s32.totalorder 2, %s14
      // Predicated region
      $region45: #{tpu_custom_call.1} parent=5 // pred_check
        %p2824 = pneg %p2823
      $region46: #{tpu_custom_call.1} parent=5 // pred_check_branch
        %2826 = sbr.rel (%p2824) target = $region48
      $region47: #{tpu_custom_call.1} parent=5 // pred_region
        %s2827 = ssub.s32 %s14, 2
        // Predicated region
        $region49: #{tpu_custom_call.1} parent=47 // pred_check
          %p2828 = pneg %p153
        $region50: #{tpu_custom_call.1} parent=47 // pred_check_branch
          %2830 = sbr.rel (%p2828) target = $region52
        $region51: #{tpu_custom_call.1} parent=47 // pred_region
          %s2831 = sand.u32 %s138, 1
          %s2832 = scalar_lea.sflag [#allocation3], %s2831
          %s2833 = sand.u32 %s138, 1
          %s2834 = smul.addr %s2833, 4
          %s2835 = scalar_lea.vmem [#allocation2], %s2834
          %2837 = dma.done %s2832, 64
        $region52: #{tpu_custom_call.1} parent=47 // pred_fallthru
          _
      $region48: #{tpu_custom_call.1} parent=5 // pred_fallthru
        _
    $region6: #{tpu_custom_call.1} parent=1 // loop_footer
      %s18 = sadd.s32 1, %s14
    $region7: #{tpu_custom_call.1} parent=1 // loop_footer_branch
      %13 = sbr.rel target = $region3
    $region8: #{tpu_custom_call.1} parent=1 // loop_exit
      _
    %2838 = vsyncpa [#allocation3], 1
    %s2839 = scalar_lea.sflag [#allocation3], 1
    %2840 = vsyncpa %s2839, 1

</llo_original>
